<compile_context>
chip_gen: v7x
topology: tpu7x:2x2x1
jax: 0.10.0
libtpu: 0.0.40
codegen_flags: <defaults>
</compile_context>

<pallas_src>
import math
import jax
import jax.numpy as jnp
from jax import lax
from jax.experimental import pallas as pl
from jax.experimental.pallas import tpu as pltpu


_VMEM_SPEC = pl.BlockSpec(memory_space=pltpu.MemorySpace.VMEM)


# ---------------------------------------------------------------------------
# Kernel factories. T / B / H are static Python ints (closed over), so the
# recurrence unrolls into straight-line code with all slice indices static.
# Gate order matches PyTorch: [i | f | g | o] along the 4H axis.
# ---------------------------------------------------------------------------
def _make_lstm_seq_kernel(T, B, H):
    """Intermediate LSTM layer: emits all hidden states as a (T*B, H) slab."""

    def kernel(x_ref, wih_ref, whh_ref, b_ref, hseq_ref):
        # Batched input projection for the whole sequence: one MXU matmul.
        xp = (jnp.dot(x_ref[...], wih_ref[...],
                      preferred_element_type=jnp.float32)
              + b_ref[...])                                     # (T*B, 4H)
        whh = whh_ref[...]                                      # (H, 4H)

        h = jnp.zeros((B, H), jnp.float32)
        c = jnp.zeros((B, H), jnp.float32)
        for t in range(T):                                      # unrolled (small T)
            gates = xp[t * B:(t + 1) * B, :] + jnp.dot(
                h, whh, preferred_element_type=jnp.float32)     # (B, 4H)
            sg = jax.nn.sigmoid(gates)                          # full-width EUP pass
            th = jnp.tanh(gates)                                # full-width EUP pass
            i_g = sg[:, 0 * H:1 * H]
            f_g = sg[:, 1 * H:2 * H]
            g_g = th[:, 2 * H:3 * H]
            o_g = sg[:, 3 * H:4 * H]
            c = f_g * c + i_g * g_g
            h = o_g * jnp.tanh(c)
            hseq_ref[t * B:(t + 1) * B, :] = h                  # VMEM store (static slice)

    return kernel


def _make_lstm_last_fc_kernel(T, B, H):
    """Last LSTM layer fused with the FC head: only h[T-1] @ W_fc^T + b_fc."""

    def kernel(x_ref, wih_ref, whh_ref, b_ref, wfc_ref, bfc_ref, out_ref):
        xp = (jnp.dot(x_ref[...], wih_ref[...],
                      preferred_element_type=jnp.float32)
              + b_ref[...])                                     # (T*B, 4H)
        whh = whh_ref[...]                                      # (H, 4H)

        h = jnp.zeros((B, H), jnp.float32)
        c = jnp.zeros((B, H), jnp.float32)
        for t in range(T):
            gates = xp[t * B:(t + 1) * B, :] + jnp.dot(
                h, whh, preferred_element_type=jnp.float32)
            sg = jax.nn.sigmoid(gates)
            th = jnp.tanh(gates)
            i_g = sg[:, 0 * H:1 * H]
            f_g = sg[:, 1 * H:2 * H]
            g_g = th[:, 2 * H:3 * H]
            o_g = sg[:, 3 * H:4 * H]
            c = f_g * c + i_g * g_g
            h = o_g * jnp.tanh(c)

        # Fused FC on the final hidden state only.
        out_ref[...] = (jnp.dot(h, wfc_ref[...],
                                preferred_element_type=jnp.float32)
                        + bfc_ref[...])

    return kernel


# ---------------------------------------------------------------------------
# Layer wrappers (single pallas_call each, no grid -> full arrays in VMEM).
# ---------------------------------------------------------------------------
def lstm_layer_seq(x2d, T, B, wih_t, whh_t, bias):
    """x2d: (T*B, F_in) time-major slab -> (T*B, H) hidden-state slab."""
    H = whh_t.shape[0]
    return pl.pallas_call(
        _make_lstm_seq_kernel(T, B, H),
        out_shape=jax.ShapeDtypeStruct((T * B, H), jnp.float32),
        in_specs=[_VMEM_SPEC] * 4,
        out_specs=_VMEM_SPEC,
    )(x2d, wih_t, whh_t, bias)


def lstm_layer_last_fc(x2d, T, B, wih_t, whh_t, bias, wfc_t, bfc):
    """Last LSTM layer + fused FC head.  Returns (B, output_size)."""
    H = whh_t.shape[0]
    O = wfc_t.shape[1]
    return pl.pallas_call(
        _make_lstm_last_fc_kernel(T, B, H),
        out_shape=jax.ShapeDtypeStruct((B, O), jnp.float32),
        in_specs=[_VMEM_SPEC] * 6,
        out_specs=_VMEM_SPEC,
    )(x2d, wih_t, whh_t, bias, wfc_t, bfc)


# ---------------------------------------------------------------------------
# Parameter init (PyTorch-style uniform) + one-time parameter preparation
# (transposes / bias fusion hoisted out of the forward pass).
# ---------------------------------------------------------------------------
def init_params(key, input_size, hidden_size, num_layers, output_size):
    bound = 1.0 / math.sqrt(hidden_size)
    params = {"lstm": []}
    for layer in range(num_layers):
        in_f = input_size if layer == 0 else hidden_size
        key, k1, k2, k3, k4 = jax.random.split(key, 5)
        params["lstm"].append({
            "w_ih": jax.random.uniform(k1, (4 * hidden_size, in_f),
                                       jnp.float32, -bound, bound),
            "w_hh": jax.random.uniform(k2, (4 * hidden_size, hidden_size),
                                       jnp.float32, -bound, bound),
            "b_ih": jax.random.uniform(k3, (4 * hidden_size,),
                                       jnp.float32, -bound, bound),
            "b_hh": jax.random.uniform(k4, (4 * hidden_size,),
                                       jnp.float32, -bound, bound),
        })
    key, k5, k6 = jax.random.split(key, 3)
    params["fc_w"] = jax.random.uniform(k5, (output_size, hidden_size),
                                        jnp.float32, -bound, bound)
    params["fc_b"] = jax.random.uniform(k6, (output_size,),
                                        jnp.float32, -bound, bound)
    return params


def prepare_params(params):
    """One-time prep: transpose weights and fuse the two LSTM biases."""
    prep = {"lstm": []}
    for layer in params["lstm"]:
        prep["lstm"].append({
            "wih_t": jnp.transpose(layer["w_ih"]),                # (F_in, 4H)
            "whh_t": jnp.transpose(layer["w_hh"]),                # (H, 4H)
            "bias": (layer["b_ih"] + layer["b_hh"])[None, :],     # (1, 4H)
        })
    prep["fc_w_t"] = jnp.transpose(params["fc_w"])                # (H, O)
    prep["fc_b"] = params["fc_b"][None, :]                        # (1, O)
    return prep


# ---------------------------------------------------------------------------
# Full model forward (matches the PyTorch module: out = fc(lstm(x)[:, -1, :]))
# ---------------------------------------------------------------------------
def lstm_model_forward(x_btf, prep):
    """x_btf: (B, T, input_size)  ->  (B, output_size)."""
    B, T, F = x_btf.shape
    # Time-major 2D slab (rows = [t0 all batch, t1 all batch, ...]).
    x2d = jnp.transpose(x_btf, (1, 0, 2)).reshape(T * B, F)
    n_layers = len(prep["lstm"])
    for idx, layer in enumerate(prep["lstm"]):
        if idx < n_layers - 1:
            x2d = lstm_layer_seq(x2d, T, B,
                                 layer["wih_t"], layer["whh_t"], layer["bias"])
        else:
            out = lstm_layer_last_fc(x2d, T, B,
                                     layer["wih_t"], layer["whh_t"],
                                     layer["bias"],
                                     prep["fc_w_t"], prep["fc_b"])
    return out


# ---------------------------------------------------------------------------
# Pure-JAX reference (lax.scan) for numerical validation.
# ---------------------------------------------------------------------------
def reference_forward(x_btf, params):
    x = jnp.transpose(x_btf, (1, 0, 2))
    for layer in params["lstm"]:
        w_ih, w_hh = layer["w_ih"], layer["w_hh"]
        b = layer["b_ih"] + layer["b_hh"]
        H = w_hh.shape[1]
        B = x.shape[1]

        def step(carry, x_t):
            h, c = carry
            gates = x_t @ w_ih.T + h @ w_hh.T + b
            i = jax.nn.sigmoid(gates[:, 0 * H:1 * H])
            f = jax.nn.sigmoid(gates[:, 1 * H:2 * H])
            g = jnp.tanh(gates[:, 2 * H:3 * H])
            o = jax.nn.sigmoid(gates[:, 3 * H:4 * H])
            c = f * c + i * g
            h = o * jnp.tanh(c)
            return (h, c), h

        init = (jnp.zeros((B, H), jnp.float32), jnp.zeros((B, H), jnp.float32))
        _, x = lax.scan(step, init, x)
    return x[-1] @ params["fc_w"].T + params["fc_b"]


if __name__ == "__main__":
    BATCH, SEQ, INPUT, HIDDEN, LAYERS, OUTPUT = 2, 8, 4, 32, 2, 3

    key = jax.random.PRNGKey(0)
    key, kx = jax.random.split(key)
    x = jax.random.normal(kx, (BATCH, SEQ, INPUT), jnp.float32)
    params = init_params(key, INPUT, HIDDEN, LAYERS, OUTPUT)
    prep = prepare_params(params)

    fwd = jax.jit(lstm_model_forward)
    out = jax.block_until_ready(fwd(x, prep))
    ref = jax.block_until_ready(reference_forward(x, params))

    assert out.shape == (BATCH, OUTPUT), out.shape
    assert jnp.allclose(out, ref, atol=1e-5, rtol=1e-5), (out, ref)
    print("KERNEL_OK")
</pallas_src>

<mosaic_0001>
module attributes {stable_mosaic.version = 11 : i64} {
  func.func @kernel(%arg0: memref<16x4xf32, #tpu.memory_space<vmem>>, %arg1: memref<4x128xf32, #tpu.memory_space<vmem>>, %arg2: memref<32x128xf32, #tpu.memory_space<vmem>>, %arg3: memref<1x128xf32, #tpu.memory_space<vmem>>, %arg4: memref<16x32xf32, #tpu.memory_space<vmem>>) attributes {dimension_semantics = [], scalar_prefetch = 0 : i64, scratch_operands = 0 : i64, tpu.core_type = #tpu.core_type<tc>} {
    %c0 = arith.constant 0 : index
    %c0_0 = arith.constant 0 : index
    %0 = vector.load %arg0[%c0, %c0_0] : memref<16x4xf32, #tpu.memory_space<vmem>>, vector<16x4xf32>
    %c0_1 = arith.constant 0 : index
    %c0_2 = arith.constant 0 : index
    %1 = vector.load %arg1[%c0_1, %c0_2] : memref<4x128xf32, #tpu.memory_space<vmem>>, vector<4x128xf32>
    %cst = arith.constant dense<0.000000e+00> : vector<16x128xf32>
    %2 = tpu.matmul %0, %1, %cst {dimension_numbers = #tpu.dot_dimension_numbers<[1], [0], [0], [1], [0, 0, 1, 1], [], []>} : vector<16x4xf32>, vector<4x128xf32>, vector<16x128xf32> -> vector<16x128xf32>
    %c0_3 = arith.constant 0 : index
    %c0_4 = arith.constant 0 : index
    %3 = vector.load %arg3[%c0_3, %c0_4] : memref<1x128xf32, #tpu.memory_space<vmem>>, vector<1x128xf32>
    %4 = vector.broadcast %3 : vector<1x128xf32> to vector<16x128xf32>
    %5 = arith.addf %2, %4 : vector<16x128xf32>
    %c0_5 = arith.constant 0 : index
    %c0_6 = arith.constant 0 : index
    %6 = vector.load %arg2[%c0_5, %c0_6] : memref<32x128xf32, #tpu.memory_space<vmem>>, vector<32x128xf32>
    %cst_7 = arith.constant 0.000000e+00 : f32
    %7 = vector.broadcast %cst_7 : f32 to vector<2x32xf32>
    %cst_8 = arith.constant 0.000000e+00 : f32
    %8 = vector.broadcast %cst_8 : f32 to vector<2x32xf32>
    %9 = vector.extract_strided_slice %5 {offsets = [0, 0], sizes = [2, 128], strides = [1, 1]} : vector<16x128xf32> to vector<2x128xf32>
    %cst_9 = arith.constant dense<0.000000e+00> : vector<2x128xf32>
    %10 = tpu.matmul %7, %6, %cst_9 {dimension_numbers = #tpu.dot_dimension_numbers<[1], [0], [0], [1], [0, 0, 1, 1], [], []>} : vector<2x32xf32>, vector<32x128xf32>, vector<2x128xf32> -> vector<2x128xf32>
    %11 = arith.addf %9, %10 : vector<2x128xf32>
    %12 = arith.negf %11 : vector<2x128xf32>
    %13 = math.exp %12 : vector<2x128xf32>
    %cst_10 = arith.constant 1.000000e+00 : f32
    %14 = vector.broadcast %cst_10 : f32 to vector<2x128xf32>
    %15 = arith.addf %14, %13 : vector<2x128xf32>
    %16 = arith.divf %14, %15 : vector<2x128xf32>
    %17 = math.tanh %11 : vector<2x128xf32>
    %18 = vector.extract_strided_slice %16 {offsets = [0, 0], sizes = [2, 32], strides = [1, 1]} : vector<2x128xf32> to vector<2x32xf32>
    %19 = vector.extract_strided_slice %16 {offsets = [0, 32], sizes = [2, 32], strides = [1, 1]} : vector<2x128xf32> to vector<2x32xf32>
    %20 = vector.extract_strided_slice %17 {offsets = [0, 64], sizes = [2, 32], strides = [1, 1]} : vector<2x128xf32> to vector<2x32xf32>
    %21 = vector.extract_strided_slice %16 {offsets = [0, 96], sizes = [2, 32], strides = [1, 1]} : vector<2x128xf32> to vector<2x32xf32>
    %22 = arith.mulf %19, %8 : vector<2x32xf32>
    %23 = arith.mulf %18, %20 : vector<2x32xf32>
    %24 = arith.addf %22, %23 : vector<2x32xf32>
    %25 = math.tanh %24 : vector<2x32xf32>
    %26 = arith.mulf %21, %25 : vector<2x32xf32>
    %c0_11 = arith.constant 0 : index
    %c0_12 = arith.constant 0 : index
    %27 = vector.load %arg4[%c0_11, %c0_12] : memref<16x32xf32, #tpu.memory_space<vmem>>, vector<2x32xf32>
    tpu.vector_store %arg4[%c0_11, %c0_12], %26 {strides = array<i32>} : memref<16x32xf32, #tpu.memory_space<vmem>>, vector<2x32xf32>,
    %28 = vector.extract_strided_slice %5 {offsets = [2, 0], sizes = [2, 128], strides = [1, 1]} : vector<16x128xf32> to vector<2x128xf32>
    %cst_13 = arith.constant dense<0.000000e+00> : vector<2x128xf32>
    %29 = tpu.matmul %26, %6, %cst_13 {dimension_numbers = #tpu.dot_dimension_numbers<[1], [0], [0], [1], [0, 0, 1, 1], [], []>} : vector<2x32xf32>, vector<32x128xf32>, vector<2x128xf32> -> vector<2x128xf32>
    %30 = arith.addf %28, %29 : vector<2x128xf32>
    %31 = arith.negf %30 : vector<2x128xf32>
    %32 = math.exp %31 : vector<2x128xf32>
    %cst_14 = arith.constant 1.000000e+00 : f32
    %33 = vector.broadcast %cst_14 : f32 to vector<2x128xf32>
    %34 = arith.addf %33, %32 : vector<2x128xf32>
    %35 = arith.divf %33, %34 : vector<2x128xf32>
    %36 = math.tanh %30 : vector<2x128xf32>
    %37 = vector.extract_strided_slice %35 {offsets = [0, 0], sizes = [2, 32], strides = [1, 1]} : vector<2x128xf32> to vector<2x32xf32>
    %38 = vector.extract_strided_slice %35 {offsets = [0, 32], sizes = [2, 32], strides = [1, 1]} : vector<2x128xf32> to vector<2x32xf32>
    %39 = vector.extract_strided_slice %36 {offsets = [0, 64], sizes = [2, 32], strides = [1, 1]} : vector<2x128xf32> to vector<2x32xf32>
    %40 = vector.extract_strided_slice %35 {offsets = [0, 96], sizes = [2, 32], strides = [1, 1]} : vector<2x128xf32> to vector<2x32xf32>
    %41 = arith.mulf %38, %24 : vector<2x32xf32>
    %42 = arith.mulf %37, %39 : vector<2x32xf32>
    %43 = arith.addf %41, %42 : vector<2x32xf32>
    %44 = math.tanh %43 : vector<2x32xf32>
    %45 = arith.mulf %40, %44 : vector<2x32xf32>
    %c2 = arith.constant 2 : index
    %c0_15 = arith.constant 0 : index
    %46 = vector.load %arg4[%c2, %c0_15] : memref<16x32xf32, #tpu.memory_space<vmem>>, vector<2x32xf32>
    tpu.vector_store %arg4[%c2, %c0_15], %45 {strides = array<i32>} : memref<16x32xf32, #tpu.memory_space<vmem>>, vector<2x32xf32>,
    %47 = vector.extract_strided_slice %5 {offsets = [4, 0], sizes = [2, 128], strides = [1, 1]} : vector<16x128xf32> to vector<2x128xf32>
    %cst_16 = arith.constant dense<0.000000e+00> : vector<2x128xf32>
    %48 = tpu.matmul %45, %6, %cst_16 {dimension_numbers = #tpu.dot_dimension_numbers<[1], [0], [0], [1], [0, 0, 1, 1], [], []>} : vector<2x32xf32>, vector<32x128xf32>, vector<2x128xf32> -> vector<2x128xf32>
    %49 = arith.addf %47, %48 : vector<2x128xf32>
    %50 = arith.negf %49 : vector<2x128xf32>
    %51 = math.exp %50 : vector<2x128xf32>
    %cst_17 = arith.constant 1.000000e+00 : f32
    %52 = vector.broadcast %cst_17 : f32 to vector<2x128xf32>
    %53 = arith.addf %52, %51 : vector<2x128xf32>
    %54 = arith.divf %52, %53 : vector<2x128xf32>
    %55 = math.tanh %49 : vector<2x128xf32>
    %56 = vector.extract_strided_slice %54 {offsets = [0, 0], sizes = [2, 32], strides = [1, 1]} : vector<2x128xf32> to vector<2x32xf32>
    %57 = vector.extract_strided_slice %54 {offsets = [0, 32], sizes = [2, 32], strides = [1, 1]} : vector<2x128xf32> to vector<2x32xf32>
    %58 = vector.extract_strided_slice %55 {offsets = [0, 64], sizes = [2, 32], strides = [1, 1]} : vector<2x128xf32> to vector<2x32xf32>
    %59 = vector.extract_strided_slice %54 {offsets = [0, 96], sizes = [2, 32], strides = [1, 1]} : vector<2x128xf32> to vector<2x32xf32>
    %60 = arith.mulf %57, %43 : vector<2x32xf32>
    %61 = arith.mulf %56, %58 : vector<2x32xf32>
    %62 = arith.addf %60, %61 : vector<2x32xf32>
    %63 = math.tanh %62 : vector<2x32xf32>
    %64 = arith.mulf %59, %63 : vector<2x32xf32>
    %c4 = arith.constant 4 : index
    %c0_18 = arith.constant 0 : index
    %65 = vector.load %arg4[%c4, %c0_18] : memref<16x32xf32, #tpu.memory_space<vmem>>, vector<2x32xf32>
    tpu.vector_store %arg4[%c4, %c0_18], %64 {strides = array<i32>} : memref<16x32xf32, #tpu.memory_space<vmem>>, vector<2x32xf32>,
    %66 = vector.extract_strided_slice %5 {offsets = [6, 0], sizes = [2, 128], strides = [1, 1]} : vector<16x128xf32> to vector<2x128xf32>
    %cst_19 = arith.constant dense<0.000000e+00> : vector<2x128xf32>
    %67 = tpu.matmul %64, %6, %cst_19 {dimension_numbers = #tpu.dot_dimension_numbers<[1], [0], [0], [1], [0, 0, 1, 1], [], []>} : vector<2x32xf32>, vector<32x128xf32>, vector<2x128xf32> -> vector<2x128xf32>
    %68 = arith.addf %66, %67 : vector<2x128xf32>
    %69 = arith.negf %68 : vector<2x128xf32>
    %70 = math.exp %69 : vector<2x128xf32>
    %cst_20 = arith.constant 1.000000e+00 : f32
    %71 = vector.broadcast %cst_20 : f32 to vector<2x128xf32>
    %72 = arith.addf %71, %70 : vector<2x128xf32>
    %73 = arith.divf %71, %72 : vector<2x128xf32>
    %74 = math.tanh %68 : vector<2x128xf32>
    %75 = vector.extract_strided_slice %73 {offsets = [0, 0], sizes = [2, 32], strides = [1, 1]} : vector<2x128xf32> to vector<2x32xf32>
    %76 = vector.extract_strided_slice %73 {offsets = [0, 32], sizes = [2, 32], strides = [1, 1]} : vector<2x128xf32> to vector<2x32xf32>
    %77 = vector.extract_strided_slice %74 {offsets = [0, 64], sizes = [2, 32], strides = [1, 1]} : vector<2x128xf32> to vector<2x32xf32>
    %78 = vector.extract_strided_slice %73 {offsets = [0, 96], sizes = [2, 32], strides = [1, 1]} : vector<2x128xf32> to vector<2x32xf32>
    %79 = arith.mulf %76, %62 : vector<2x32xf32>
    %80 = arith.mulf %75, %77 : vector<2x32xf32>
    %81 = arith.addf %79, %80 : vector<2x32xf32>
    %82 = math.tanh %81 : vector<2x32xf32>
    %83 = arith.mulf %78, %82 : vector<2x32xf32>
    %c6 = arith.constant 6 : index
    %c0_21 = arith.constant 0 : index
    %84 = vector.load %arg4[%c6, %c0_21] : memref<16x32xf32, #tpu.memory_space<vmem>>, vector<2x32xf32>
    tpu.vector_store %arg4[%c6, %c0_21], %83 {strides = array<i32>} : memref<16x32xf32, #tpu.memory_space<vmem>>, vector<2x32xf32>,
    %85 = vector.extract_strided_slice %5 {offsets = [8, 0], sizes = [2, 128], strides = [1, 1]} : vector<16x128xf32> to vector<2x128xf32>
    %cst_22 = arith.constant dense<0.000000e+00> : vector<2x128xf32>
    %86 = tpu.matmul %83, %6, %cst_22 {dimension_numbers = #tpu.dot_dimension_numbers<[1], [0], [0], [1], [0, 0, 1, 1], [], []>} : vector<2x32xf32>, vector<32x128xf32>, vector<2x128xf32> -> vector<2x128xf32>
    %87 = arith.addf %85, %86 : vector<2x128xf32>
    %88 = arith.negf %87 : vector<2x128xf32>
    %89 = math.exp %88 : vector<2x128xf32>
    %cst_23 = arith.constant 1.000000e+00 : f32
    %90 = vector.broadcast %cst_23 : f32 to vector<2x128xf32>
    %91 = arith.addf %90, %89 : vector<2x128xf32>
    %92 = arith.divf %90, %91 : vector<2x128xf32>
    %93 = math.tanh %87 : vector<2x128xf32>
    %94 = vector.extract_strided_slice %92 {offsets = [0, 0], sizes = [2, 32], strides = [1, 1]} : vector<2x128xf32> to vector<2x32xf32>
    %95 = vector.extract_strided_slice %92 {offsets = [0, 32], sizes = [2, 32], strides = [1, 1]} : vector<2x128xf32> to vector<2x32xf32>
    %96 = vector.extract_strided_slice %93 {offsets = [0, 64], sizes = [2, 32], strides = [1, 1]} : vector<2x128xf32> to vector<2x32xf32>
    %97 = vector.extract_strided_slice %92 {offsets = [0, 96], sizes = [2, 32], strides = [1, 1]} : vector<2x128xf32> to vector<2x32xf32>
    %98 = arith.mulf %95, %81 : vector<2x32xf32>
    %99 = arith.mulf %94, %96 : vector<2x32xf32>
    %100 = arith.addf %98, %99 : vector<2x32xf32>
    %101 = math.tanh %100 : vector<2x32xf32>
    %102 = arith.mulf %97, %101 : vector<2x32xf32>
    %c8 = arith.constant 8 : index
    %c0_24 = arith.constant 0 : index
    %103 = vector.load %arg4[%c8, %c0_24] : memref<16x32xf32, #tpu.memory_space<vmem>>, vector<2x32xf32>
    tpu.vector_store %arg4[%c8, %c0_24], %102 {strides = array<i32>} : memref<16x32xf32, #tpu.memory_space<vmem>>, vector<2x32xf32>,
    %104 = vector.extract_strided_slice %5 {offsets = [10, 0], sizes = [2, 128], strides = [1, 1]} : vector<16x128xf32> to vector<2x128xf32>
    %cst_25 = arith.constant dense<0.000000e+00> : vector<2x128xf32>
    %105 = tpu.matmul %102, %6, %cst_25 {dimension_numbers = #tpu.dot_dimension_numbers<[1], [0], [0], [1], [0, 0, 1, 1], [], []>} : vector<2x32xf32>, vector<32x128xf32>, vector<2x128xf32> -> vector<2x128xf32>
    %106 = arith.addf %104, %105 : vector<2x128xf32>
    %107 = arith.negf %106 : vector<2x128xf32>
    %108 = math.exp %107 : vector<2x128xf32>
    %cst_26 = arith.constant 1.000000e+00 : f32
    %109 = vector.broadcast %cst_26 : f32 to vector<2x128xf32>
    %110 = arith.addf %109, %108 : vector<2x128xf32>
    %111 = arith.divf %109, %110 : vector<2x128xf32>
    %112 = math.tanh %106 : vector<2x128xf32>
    %113 = vector.extract_strided_slice %111 {offsets = [0, 0], sizes = [2, 32], strides = [1, 1]} : vector<2x128xf32> to vector<2x32xf32>
    %114 = vector.extract_strided_slice %111 {offsets = [0, 32], sizes = [2, 32], strides = [1, 1]} : vector<2x128xf32> to vector<2x32xf32>
    %115 = vector.extract_strided_slice %112 {offsets = [0, 64], sizes = [2, 32], strides = [1, 1]} : vector<2x128xf32> to vector<2x32xf32>
    %116 = vector.extract_strided_slice %111 {offsets = [0, 96], sizes = [2, 32], strides = [1, 1]} : vector<2x128xf32> to vector<2x32xf32>
    %117 = arith.mulf %114, %100 : vector<2x32xf32>
    %118 = arith.mulf %113, %115 : vector<2x32xf32>
    %119 = arith.addf %117, %118 : vector<2x32xf32>
    %120 = math.tanh %119 : vector<2x32xf32>
    %121 = arith.mulf %116, %120 : vector<2x32xf32>
    %c10 = arith.constant 10 : index
    %c0_27 = arith.constant 0 : index
    %122 = vector.load %arg4[%c10, %c0_27] : memref<16x32xf32, #tpu.memory_space<vmem>>, vector<2x32xf32>
    tpu.vector_store %arg4[%c10, %c0_27], %121 {strides = array<i32>} : memref<16x32xf32, #tpu.memory_space<vmem>>, vector<2x32xf32>,
    %123 = vector.extract_strided_slice %5 {offsets = [12, 0], sizes = [2, 128], strides = [1, 1]} : vector<16x128xf32> to vector<2x128xf32>
    %cst_28 = arith.constant dense<0.000000e+00> : vector<2x128xf32>
    %124 = tpu.matmul %121, %6, %cst_28 {dimension_numbers = #tpu.dot_dimension_numbers<[1], [0], [0], [1], [0, 0, 1, 1], [], []>} : vector<2x32xf32>, vector<32x128xf32>, vector<2x128xf32> -> vector<2x128xf32>
    %125 = arith.addf %123, %124 : vector<2x128xf32>
    %126 = arith.negf %125 : vector<2x128xf32>
    %127 = math.exp %126 : vector<2x128xf32>
    %cst_29 = arith.constant 1.000000e+00 : f32
    %128 = vector.broadcast %cst_29 : f32 to vector<2x128xf32>
    %129 = arith.addf %128, %127 : vector<2x128xf32>
    %130 = arith.divf %128, %129 : vector<2x128xf32>
    %131 = math.tanh %125 : vector<2x128xf32>
    %132 = vector.extract_strided_slice %130 {offsets = [0, 0], sizes = [2, 32], strides = [1, 1]} : vector<2x128xf32> to vector<2x32xf32>
    %133 = vector.extract_strided_slice %130 {offsets = [0, 32], sizes = [2, 32], strides = [1, 1]} : vector<2x128xf32> to vector<2x32xf32>
    %134 = vector.extract_strided_slice %131 {offsets = [0, 64], sizes = [2, 32], strides = [1, 1]} : vector<2x128xf32> to vector<2x32xf32>
    %135 = vector.extract_strided_slice %130 {offsets = [0, 96], sizes = [2, 32], strides = [1, 1]} : vector<2x128xf32> to vector<2x32xf32>
    %136 = arith.mulf %133, %119 : vector<2x32xf32>
    %137 = arith.mulf %132, %134 : vector<2x32xf32>
    %138 = arith.addf %136, %137 : vector<2x32xf32>
    %139 = math.tanh %138 : vector<2x32xf32>
    %140 = arith.mulf %135, %139 : vector<2x32xf32>
    %c12 = arith.constant 12 : index
    %c0_30 = arith.constant 0 : index
    %141 = vector.load %arg4[%c12, %c0_30] : memref<16x32xf32, #tpu.memory_space<vmem>>, vector<2x32xf32>
    tpu.vector_store %arg4[%c12, %c0_30], %140 {strides = array<i32>} : memref<16x32xf32, #tpu.memory_space<vmem>>, vector<2x32xf32>,
    %142 = vector.extract_strided_slice %5 {offsets = [14, 0], sizes = [2, 128], strides = [1, 1]} : vector<16x128xf32> to vector<2x128xf32>
    %cst_31 = arith.constant dense<0.000000e+00> : vector<2x128xf32>
    %143 = tpu.matmul %140, %6, %cst_31 {dimension_numbers = #tpu.dot_dimension_numbers<[1], [0], [0], [1], [0, 0, 1, 1], [], []>} : vector<2x32xf32>, vector<32x128xf32>, vector<2x128xf32> -> vector<2x128xf32>
    %144 = arith.addf %142, %143 : vector<2x128xf32>
    %145 = arith.negf %144 : vector<2x128xf32>
    %146 = math.exp %145 : vector<2x128xf32>
    %cst_32 = arith.constant 1.000000e+00 : f32
    %147 = vector.broadcast %cst_32 : f32 to vector<2x128xf32>
    %148 = arith.addf %147, %146 : vector<2x128xf32>
    %149 = arith.divf %147, %148 : vector<2x128xf32>
    %150 = math.tanh %144 : vector<2x128xf32>
    %151 = vector.extract_strided_slice %149 {offsets = [0, 0], sizes = [2, 32], strides = [1, 1]} : vector<2x128xf32> to vector<2x32xf32>
    %152 = vector.extract_strided_slice %149 {offsets = [0, 32], sizes = [2, 32], strides = [1, 1]} : vector<2x128xf32> to vector<2x32xf32>
    %153 = vector.extract_strided_slice %150 {offsets = [0, 64], sizes = [2, 32], strides = [1, 1]} : vector<2x128xf32> to vector<2x32xf32>
    %154 = vector.extract_strided_slice %149 {offsets = [0, 96], sizes = [2, 32], strides = [1, 1]} : vector<2x128xf32> to vector<2x32xf32>
    %155 = arith.mulf %152, %138 : vector<2x32xf32>
    %156 = arith.mulf %151, %153 : vector<2x32xf32>
    %157 = arith.addf %155, %156 : vector<2x32xf32>
    %158 = math.tanh %157 : vector<2x32xf32>
    %159 = arith.mulf %154, %158 : vector<2x32xf32>
    %c14 = arith.constant 14 : index
    %c0_33 = arith.constant 0 : index
    %160 = vector.load %arg4[%c14, %c0_33] : memref<16x32xf32, #tpu.memory_space<vmem>>, vector<2x32xf32>
    tpu.vector_store %arg4[%c14, %c0_33], %159 {strides = array<i32>} : memref<16x32xf32, #tpu.memory_space<vmem>>, vector<2x32xf32>,
    return
  }
}

module attributes {stable_mosaic.version = 11 : i64} {
  func.func @kernel(%arg0: memref<16x32xf32, #tpu.memory_space<vmem>>, %arg1: memref<32x128xf32, #tpu.memory_space<vmem>>, %arg2: memref<32x128xf32, #tpu.memory_space<vmem>>, %arg3: memref<1x128xf32, #tpu.memory_space<vmem>>, %arg4: memref<32x3xf32, #tpu.memory_space<vmem>>, %arg5: memref<1x3xf32, #tpu.memory_space<vmem>>, %arg6: memref<2x3xf32, #tpu.memory_space<vmem>>) attributes {dimension_semantics = [], scalar_prefetch = 0 : i64, scratch_operands = 0 : i64, tpu.core_type = #tpu.core_type<tc>} {
    %c0 = arith.constant 0 : index
    %c0_0 = arith.constant 0 : index
    %0 = vector.load %arg0[%c0, %c0_0] : memref<16x32xf32, #tpu.memory_space<vmem>>, vector<16x32xf32>
    %c0_1 = arith.constant 0 : index
    %c0_2 = arith.constant 0 : index
    %1 = vector.load %arg1[%c0_1, %c0_2] : memref<32x128xf32, #tpu.memory_space<vmem>>, vector<32x128xf32>
    %cst = arith.constant dense<0.000000e+00> : vector<16x128xf32>
    %2 = tpu.matmul %0, %1, %cst {dimension_numbers = #tpu.dot_dimension_numbers<[1], [0], [0], [1], [0, 0, 1, 1], [], []>} : vector<16x32xf32>, vector<32x128xf32>, vector<16x128xf32> -> vector<16x128xf32>
    %c0_3 = arith.constant 0 : index
    %c0_4 = arith.constant 0 : index
    %3 = vector.load %arg3[%c0_3, %c0_4] : memref<1x128xf32, #tpu.memory_space<vmem>>, vector<1x128xf32>
    %4 = vector.broadcast %3 : vector<1x128xf32> to vector<16x128xf32>
    %5 = arith.addf %2, %4 : vector<16x128xf32>
    %c0_5 = arith.constant 0 : index
    %c0_6 = arith.constant 0 : index
    %6 = vector.load %arg2[%c0_5, %c0_6] : memref<32x128xf32, #tpu.memory_space<vmem>>, vector<32x128xf32>
    %cst_7 = arith.constant 0.000000e+00 : f32
    %7 = vector.broadcast %cst_7 : f32 to vector<2x32xf32>
    %cst_8 = arith.constant 0.000000e+00 : f32
    %8 = vector.broadcast %cst_8 : f32 to vector<2x32xf32>
    %9 = vector.extract_strided_slice %5 {offsets = [0, 0], sizes = [2, 128], strides = [1, 1]} : vector<16x128xf32> to vector<2x128xf32>
    %cst_9 = arith.constant dense<0.000000e+00> : vector<2x128xf32>
    %10 = tpu.matmul %7, %6, %cst_9 {dimension_numbers = #tpu.dot_dimension_numbers<[1], [0], [0], [1], [0, 0, 1, 1], [], []>} : vector<2x32xf32>, vector<32x128xf32>, vector<2x128xf32> -> vector<2x128xf32>
    %11 = arith.addf %9, %10 : vector<2x128xf32>
    %12 = arith.negf %11 : vector<2x128xf32>
    %13 = math.exp %12 : vector<2x128xf32>
    %cst_10 = arith.constant 1.000000e+00 : f32
    %14 = vector.broadcast %cst_10 : f32 to vector<2x128xf32>
    %15 = arith.addf %14, %13 : vector<2x128xf32>
    %16 = arith.divf %14, %15 : vector<2x128xf32>
    %17 = math.tanh %11 : vector<2x128xf32>
    %18 = vector.extract_strided_slice %16 {offsets = [0, 0], sizes = [2, 32], strides = [1, 1]} : vector<2x128xf32> to vector<2x32xf32>
    %19 = vector.extract_strided_slice %16 {offsets = [0, 32], sizes = [2, 32], strides = [1, 1]} : vector<2x128xf32> to vector<2x32xf32>
    %20 = vector.extract_strided_slice %17 {offsets = [0, 64], sizes = [2, 32], strides = [1, 1]} : vector<2x128xf32> to vector<2x32xf32>
    %21 = vector.extract_strided_slice %16 {offsets = [0, 96], sizes = [2, 32], strides = [1, 1]} : vector<2x128xf32> to vector<2x32xf32>
    %22 = arith.mulf %19, %8 : vector<2x32xf32>
    %23 = arith.mulf %18, %20 : vector<2x32xf32>
    %24 = arith.addf %22, %23 : vector<2x32xf32>
    %25 = math.tanh %24 : vector<2x32xf32>
    %26 = arith.mulf %21, %25 : vector<2x32xf32>
    %27 = vector.extract_strided_slice %5 {offsets = [2, 0], sizes = [2, 128], strides = [1, 1]} : vector<16x128xf32> to vector<2x128xf32>
    %cst_11 = arith.constant dense<0.000000e+00> : vector<2x128xf32>
    %28 = tpu.matmul %26, %6, %cst_11 {dimension_numbers = #tpu.dot_dimension_numbers<[1], [0], [0], [1], [0, 0, 1, 1], [], []>} : vector<2x32xf32>, vector<32x128xf32>, vector<2x128xf32> -> vector<2x128xf32>
    %29 = arith.addf %27, %28 : vector<2x128xf32>
    %30 = arith.negf %29 : vector<2x128xf32>
    %31 = math.exp %30 : vector<2x128xf32>
    %cst_12 = arith.constant 1.000000e+00 : f32
    %32 = vector.broadcast %cst_12 : f32 to vector<2x128xf32>
    %33 = arith.addf %32, %31 : vector<2x128xf32>
    %34 = arith.divf %32, %33 : vector<2x128xf32>
    %35 = math.tanh %29 : vector<2x128xf32>
    %36 = vector.extract_strided_slice %34 {offsets = [0, 0], sizes = [2, 32], strides = [1, 1]} : vector<2x128xf32> to vector<2x32xf32>
    %37 = vector.extract_strided_slice %34 {offsets = [0, 32], sizes = [2, 32], strides = [1, 1]} : vector<2x128xf32> to vector<2x32xf32>
    %38 = vector.extract_strided_slice %35 {offsets = [0, 64], sizes = [2, 32], strides = [1, 1]} : vector<2x128xf32> to vector<2x32xf32>
    %39 = vector.extract_strided_slice %34 {offsets = [0, 96], sizes = [2, 32], strides = [1, 1]} : vector<2x128xf32> to vector<2x32xf32>
    %40 = arith.mulf %37, %24 : vector<2x32xf32>
    %41 = arith.mulf %36, %38 : vector<2x32xf32>
    %42 = arith.addf %40, %41 : vector<2x32xf32>
    %43 = math.tanh %42 : vector<2x32xf32>
    %44 = arith.mulf %39, %43 : vector<2x32xf32>
    %45 = vector.extract_strided_slice %5 {offsets = [4, 0], sizes = [2, 128], strides = [1, 1]} : vector<16x128xf32> to vector<2x128xf32>
    %cst_13 = arith.constant dense<0.000000e+00> : vector<2x128xf32>
    %46 = tpu.matmul %44, %6, %cst_13 {dimension_numbers = #tpu.dot_dimension_numbers<[1], [0], [0], [1], [0, 0, 1, 1], [], []>} : vector<2x32xf32>, vector<32x128xf32>, vector<2x128xf32> -> vector<2x128xf32>
    %47 = arith.addf %45, %46 : vector<2x128xf32>
    %48 = arith.negf %47 : vector<2x128xf32>
    %49 = math.exp %48 : vector<2x128xf32>
    %cst_14 = arith.constant 1.000000e+00 : f32
    %50 = vector.broadcast %cst_14 : f32 to vector<2x128xf32>
    %51 = arith.addf %50, %49 : vector<2x128xf32>
    %52 = arith.divf %50, %51 : vector<2x128xf32>
    %53 = math.tanh %47 : vector<2x128xf32>
    %54 = vector.extract_strided_slice %52 {offsets = [0, 0], sizes = [2, 32], strides = [1, 1]} : vector<2x128xf32> to vector<2x32xf32>
    %55 = vector.extract_strided_slice %52 {offsets = [0, 32], sizes = [2, 32], strides = [1, 1]} : vector<2x128xf32> to vector<2x32xf32>
    %56 = vector.extract_strided_slice %53 {offsets = [0, 64], sizes = [2, 32], strides = [1, 1]} : vector<2x128xf32> to vector<2x32xf32>
    %57 = vector.extract_strided_slice %52 {offsets = [0, 96], sizes = [2, 32], strides = [1, 1]} : vector<2x128xf32> to vector<2x32xf32>
    %58 = arith.mulf %55, %42 : vector<2x32xf32>
    %59 = arith.mulf %54, %56 : vector<2x32xf32>
    %60 = arith.addf %58, %59 : vector<2x32xf32>
    %61 = math.tanh %60 : vector<2x32xf32>
    %62 = arith.mulf %57, %61 : vector<2x32xf32>
    %63 = vector.extract_strided_slice %5 {offsets = [6, 0], sizes = [2, 128], strides = [1, 1]} : vector<16x128xf32> to vector<2x128xf32>
    %cst_15 = arith.constant dense<0.000000e+00> : vector<2x128xf32>
    %64 = tpu.matmul %62, %6, %cst_15 {dimension_numbers = #tpu.dot_dimension_numbers<[1], [0], [0], [1], [0, 0, 1, 1], [], []>} : vector<2x32xf32>, vector<32x128xf32>, vector<2x128xf32> -> vector<2x128xf32>
    %65 = arith.addf %63, %64 : vector<2x128xf32>
    %66 = arith.negf %65 : vector<2x128xf32>
    %67 = math.exp %66 : vector<2x128xf32>
    %cst_16 = arith.constant 1.000000e+00 : f32
    %68 = vector.broadcast %cst_16 : f32 to vector<2x128xf32>
    %69 = arith.addf %68, %67 : vector<2x128xf32>
    %70 = arith.divf %68, %69 : vector<2x128xf32>
    %71 = math.tanh %65 : vector<2x128xf32>
    %72 = vector.extract_strided_slice %70 {offsets = [0, 0], sizes = [2, 32], strides = [1, 1]} : vector<2x128xf32> to vector<2x32xf32>
    %73 = vector.extract_strided_slice %70 {offsets = [0, 32], sizes = [2, 32], strides = [1, 1]} : vector<2x128xf32> to vector<2x32xf32>
    %74 = vector.extract_strided_slice %71 {offsets = [0, 64], sizes = [2, 32], strides = [1, 1]} : vector<2x128xf32> to vector<2x32xf32>
    %75 = vector.extract_strided_slice %70 {offsets = [0, 96], sizes = [2, 32], strides = [1, 1]} : vector<2x128xf32> to vector<2x32xf32>
    %76 = arith.mulf %73, %60 : vector<2x32xf32>
    %77 = arith.mulf %72, %74 : vector<2x32xf32>
    %78 = arith.addf %76, %77 : vector<2x32xf32>
    %79 = math.tanh %78 : vector<2x32xf32>
    %80 = arith.mulf %75, %79 : vector<2x32xf32>
    %81 = vector.extract_strided_slice %5 {offsets = [8, 0], sizes = [2, 128], strides = [1, 1]} : vector<16x128xf32> to vector<2x128xf32>
    %cst_17 = arith.constant dense<0.000000e+00> : vector<2x128xf32>
    %82 = tpu.matmul %80, %6, %cst_17 {dimension_numbers = #tpu.dot_dimension_numbers<[1], [0], [0], [1], [0, 0, 1, 1], [], []>} : vector<2x32xf32>, vector<32x128xf32>, vector<2x128xf32> -> vector<2x128xf32>
    %83 = arith.addf %81, %82 : vector<2x128xf32>
    %84 = arith.negf %83 : vector<2x128xf32>
    %85 = math.exp %84 : vector<2x128xf32>
    %cst_18 = arith.constant 1.000000e+00 : f32
    %86 = vector.broadcast %cst_18 : f32 to vector<2x128xf32>
    %87 = arith.addf %86, %85 : vector<2x128xf32>
    %88 = arith.divf %86, %87 : vector<2x128xf32>
    %89 = math.tanh %83 : vector<2x128xf32>
    %90 = vector.extract_strided_slice %88 {offsets = [0, 0], sizes = [2, 32], strides = [1, 1]} : vector<2x128xf32> to vector<2x32xf32>
    %91 = vector.extract_strided_slice %88 {offsets = [0, 32], sizes = [2, 32], strides = [1, 1]} : vector<2x128xf32> to vector<2x32xf32>
    %92 = vector.extract_strided_slice %89 {offsets = [0, 64], sizes = [2, 32], strides = [1, 1]} : vector<2x128xf32> to vector<2x32xf32>
    %93 = vector.extract_strided_slice %88 {offsets = [0, 96], sizes = [2, 32], strides = [1, 1]} : vector<2x128xf32> to vector<2x32xf32>
    %94 = arith.mulf %91, %78 : vector<2x32xf32>
    %95 = arith.mulf %90, %92 : vector<2x32xf32>
    %96 = arith.addf %94, %95 : vector<2x32xf32>
    %97 = math.tanh %96 : vector<2x32xf32>
    %98 = arith.mulf %93, %97 : vector<2x32xf32>
    %99 = vector.extract_strided_slice %5 {offsets = [10, 0], sizes = [2, 128], strides = [1, 1]} : vector<16x128xf32> to vector<2x128xf32>
    %cst_19 = arith.constant dense<0.000000e+00> : vector<2x128xf32>
    %100 = tpu.matmul %98, %6, %cst_19 {dimension_numbers = #tpu.dot_dimension_numbers<[1], [0], [0], [1], [0, 0, 1, 1], [], []>} : vector<2x32xf32>, vector<32x128xf32>, vector<2x128xf32> -> vector<2x128xf32>
    %101 = arith.addf %99, %100 : vector<2x128xf32>
    %102 = arith.negf %101 : vector<2x128xf32>
    %103 = math.exp %102 : vector<2x128xf32>
    %cst_20 = arith.constant 1.000000e+00 : f32
    %104 = vector.broadcast %cst_20 : f32 to vector<2x128xf32>
    %105 = arith.addf %104, %103 : vector<2x128xf32>
    %106 = arith.divf %104, %105 : vector<2x128xf32>
    %107 = math.tanh %101 : vector<2x128xf32>
    %108 = vector.extract_strided_slice %106 {offsets = [0, 0], sizes = [2, 32], strides = [1, 1]} : vector<2x128xf32> to vector<2x32xf32>
    %109 = vector.extract_strided_slice %106 {offsets = [0, 32], sizes = [2, 32], strides = [1, 1]} : vector<2x128xf32> to vector<2x32xf32>
    %110 = vector.extract_strided_slice %107 {offsets = [0, 64], sizes = [2, 32], strides = [1, 1]} : vector<2x128xf32> to vector<2x32xf32>
    %111 = vector.extract_strided_slice %106 {offsets = [0, 96], sizes = [2, 32], strides = [1, 1]} : vector<2x128xf32> to vector<2x32xf32>
    %112 = arith.mulf %109, %96 : vector<2x32xf32>
    %113 = arith.mulf %108, %110 : vector<2x32xf32>
    %114 = arith.addf %112, %113 : vector<2x32xf32>
    %115 = math.tanh %114 : vector<2x32xf32>
    %116 = arith.mulf %111, %115 : vector<2x32xf32>
    %117 = vector.extract_strided_slice %5 {offsets = [12, 0], sizes = [2, 128], strides = [1, 1]} : vector<16x128xf32> to vector<2x128xf32>
    %cst_21 = arith.constant dense<0.000000e+00> : vector<2x128xf32>
    %118 = tpu.matmul %116, %6, %cst_21 {dimension_numbers = #tpu.dot_dimension_numbers<[1], [0], [0], [1], [0, 0, 1, 1], [], []>} : vector<2x32xf32>, vector<32x128xf32>, vector<2x128xf32> -> vector<2x128xf32>
    %119 = arith.addf %117, %118 : vector<2x128xf32>
    %120 = arith.negf %119 : vector<2x128xf32>
    %121 = math.exp %120 : vector<2x128xf32>
    %cst_22 = arith.constant 1.000000e+00 : f32
    %122 = vector.broadcast %cst_22 : f32 to vector<2x128xf32>
    %123 = arith.addf %122, %121 : vector<2x128xf32>
    %124 = arith.divf %122, %123 : vector<2x128xf32>
    %125 = math.tanh %119 : vector<2x128xf32>
    %126 = vector.extract_strided_slice %124 {offsets = [0, 0], sizes = [2, 32], strides = [1, 1]} : vector<2x128xf32> to vector<2x32xf32>
    %127 = vector.extract_strided_slice %124 {offsets = [0, 32], sizes = [2, 32], strides = [1, 1]} : vector<2x128xf32> to vector<2x32xf32>
    %128 = vector.extract_strided_slice %125 {offsets = [0, 64], sizes = [2, 32], strides = [1, 1]} : vector<2x128xf32> to vector<2x32xf32>
    %129 = vector.extract_strided_slice %124 {offsets = [0, 96], sizes = [2, 32], strides = [1, 1]} : vector<2x128xf32> to vector<2x32xf32>
    %130 = arith.mulf %127, %114 : vector<2x32xf32>
    %131 = arith.mulf %126, %128 : vector<2x32xf32>
    %132 = arith.addf %130, %131 : vector<2x32xf32>
    %133 = math.tanh %132 : vector<2x32xf32>
    %134 = arith.mulf %129, %133 : vector<2x32xf32>
    %135 = vector.extract_strided_slice %5 {offsets = [14, 0], sizes = [2, 128], strides = [1, 1]} : vector<16x128xf32> to vector<2x128xf32>
    %cst_23 = arith.constant dense<0.000000e+00> : vector<2x128xf32>
    %136 = tpu.matmul %134, %6, %cst_23 {dimension_numbers = #tpu.dot_dimension_numbers<[1], [0], [0], [1], [0, 0, 1, 1], [], []>} : vector<2x32xf32>, vector<32x128xf32>, vector<2x128xf32> -> vector<2x128xf32>
    %137 = arith.addf %135, %136 : vector<2x128xf32>
    %138 = arith.negf %137 : vector<2x128xf32>
    %139 = math.exp %138 : vector<2x128xf32>
    %cst_24 = arith.constant 1.000000e+00 : f32
    %140 = vector.broadcast %cst_24 : f32 to vector<2x128xf32>
    %141 = arith.addf %140, %139 : vector<2x128xf32>
    %142 = arith.divf %140, %141 : vector<2x128xf32>
    %143 = math.tanh %137 : vector<2x128xf32>
    %144 = vector.extract_strided_slice %142 {offsets = [0, 0], sizes = [2, 32], strides = [1, 1]} : vector<2x128xf32> to vector<2x32xf32>
    %145 = vector.extract_strided_slice %142 {offsets = [0, 32], sizes = [2, 32], strides = [1, 1]} : vector<2x128xf32> to vector<2x32xf32>
    %146 = vector.extract_strided_slice %143 {offsets = [0, 64], sizes = [2, 32], strides = [1, 1]} : vector<2x128xf32> to vector<2x32xf32>
    %147 = vector.extract_strided_slice %142 {offsets = [0, 96], sizes = [2, 32], strides = [1, 1]} : vector<2x128xf32> to vector<2x32xf32>
    %148 = arith.mulf %145, %132 : vector<2x32xf32>
    %149 = arith.mulf %144, %146 : vector<2x32xf32>
    %150 = arith.addf %148, %149 : vector<2x32xf32>
    %151 = math.tanh %150 : vector<2x32xf32>
    %152 = arith.mulf %147, %151 : vector<2x32xf32>
    %c0_25 = arith.constant 0 : index
    %c0_26 = arith.constant 0 : index
    %153 = vector.load %arg4[%c0_25, %c0_26] : memref<32x3xf32, #tpu.memory_space<vmem>>, vector<32x3xf32>
    %cst_27 = arith.constant dense<0.000000e+00> : vector<2x3xf32>
    %154 = tpu.matmul %152, %153, %cst_27 {dimension_numbers = #tpu.dot_dimension_numbers<[1], [0], [0], [1], [0, 0, 1, 1], [], []>} : vector<2x32xf32>, vector<32x3xf32>, vector<2x3xf32> -> vector<2x3xf32>
    %c0_28 = arith.constant 0 : index
    %c0_29 = arith.constant 0 : index
    %155 = vector.load %arg5[%c0_28, %c0_29] : memref<1x3xf32, #tpu.memory_space<vmem>>, vector<1x3xf32>
    %156 = vector.broadcast %155 : vector<1x3xf32> to vector<2x3xf32>
    %157 = arith.addf %154, %156 : vector<2x3xf32>
    %c0_30 = arith.constant 0 : index
    %c0_31 = arith.constant 0 : index
    %158 = vector.load %arg6[%c0_30, %c0_31] : memref<2x3xf32, #tpu.memory_space<vmem>>, vector<2x3xf32>
    tpu.vector_store %arg6[%c0_30, %c0_31], %157 {strides = array<i32>} : memref<2x3xf32, #tpu.memory_space<vmem>>, vector<2x3xf32>,
    return
  }
}

</mosaic_0001>

<llo_original>
// kernel: lstm_model_forward.2
$region0: #{lstm_model_forward.2}
  #allocation0 [shape = 'u32[]', space=smem, size = 0x4, offset = 0x4, fixed_abs, tag = 'smem constant byte address 0x4 - core index']
  #allocation1 [shape = 'u32[144,128]{1,0:T(1,128)}', space=vmem, size = 0x12000, scoped, tag = 'internal scratch']
  %s0 = inlined_call_operand.vmem [shape: f32[16,4], index: 0, kind: input, shape index: {}]
  %s1 = inlined_call_operand.vmem [shape: f32[4,128], index: 1, kind: input, shape index: {}]
  %s2 = inlined_call_operand.vmem [shape: f32[32,128], index: 2, kind: input, shape index: {}]
  %s3 = inlined_call_operand.vmem [shape: f32[1,128], index: 3, kind: input, shape index: {}]
  %s4 = inlined_call_operand.vmem [shape: f32[16,32], index: 4, kind: output, shape index: {}]
  %s5 = sld [smem:[#allocation0]]
  $region26: #{lstm_model_forward.2} parent=0
    _
  %s7 = ssub.s32 1, %s5
  %s8 = scalar_select 0, %s7, %s5
  // Predicated region
  $region2: #{lstm_model_forward.2} parent=0 // pred_check
    _
  $region3: #{lstm_model_forward.2} parent=0 // pred_check_branch
    %10 = sbr.rel (0) target = $region5
  $region4: #{lstm_model_forward.2} parent=0 // pred_region
    _
  $region5: #{lstm_model_forward.2} parent=0 // pred_fallthru
    _
  // Predicated region
  $region6: #{lstm_model_forward.2} parent=0 // pred_check
    _
  $region7: #{lstm_model_forward.2} parent=0 // pred_check_branch
    %12 = sbr.rel (0) target = $region9
  $region8: #{lstm_model_forward.2} parent=0 // pred_region
    _
  $region9: #{lstm_model_forward.2} parent=0 // pred_fallthru
    _
  // Predicated region
  $region10: #{lstm_model_forward.2} parent=0 // pred_check
    _
  $region11: #{lstm_model_forward.2} parent=0 // pred_check_branch
    %14 = sbr.rel (0) target = $region13
  $region12: #{lstm_model_forward.2} parent=0 // pred_region
    _
  $region13: #{lstm_model_forward.2} parent=0 // pred_fallthru
    _
  // Predicated region
  $region14: #{lstm_model_forward.2} parent=0 // pred_check
    _
  $region15: #{lstm_model_forward.2} parent=0 // pred_check_branch
    %16 = sbr.rel (0) target = $region17
  $region16: #{lstm_model_forward.2} parent=0 // pred_region
    _
  $region17: #{lstm_model_forward.2} parent=0 // pred_fallthru
    _
  %v17 = vld [vmem:[%s0] sm:$0xff]
  %v18 = vld [vmem:[%s0 + $0x8] sm:$0xff]
  %v19 = vld [vmem:[%s1] sm:$0xf]
  %v20 = vld [vmem:[%s3] sm:$0x1]
  %v22 = vlaneseq
  %v23 = vshrl.u32 %v22, 7
  %v24 = vsub.s32 0, %v23
  %v25 = vrot.slane %v20, %v24
  %vm27 = vcmask 31744
  %v29 = vsel %vm27, %v17, 0
  %v32 = vsel %vm27, %v18, 0
  %vm34 = vcmask 1043456
  %v36 = vsel %vm34, %v19, 0
  %38 = vmatprep.subr.mxu0 0.0
  %39 = vmatpush1.msra.mxu0 %v36
  %40 = vmatprep.subr.mxu0 0.0
  %41 = vmatpush1.msra.mxu0 0.0
  %42 = vmatprep.subr.mxu0 0.0
  %43 = vmatpush1.msra.mxu0 0.0
  %44 = vmatprep.subr.mxu0 0.0
  %45 = vmatpush1.msra.mxu0 0.0
  %46 = vmatprep.subr.mxu0 0.0
  %47 = vmatpush1.msra.mxu0 0.0
  %48 = vmatprep.subr.mxu0 0.0
  %49 = vmatpush1.msra.mxu0 0.0
  %50 = vmatprep.subr.mxu0 0.0
  %51 = vmatpush1.msra.mxu0 0.0
  %52 = vmatprep.subr.mxu0 0.0
  %53 = vmatpush1.msra.mxu0 0.0
  %54 = vmatprep.subr.mxu0 0.0
  %55 = vmatpush1.msra.mxu0 0.0
  %56 = vmatprep.subr.mxu0 0.0
  %57 = vmatpush1.msra.mxu0 0.0
  %58 = vmatprep.subr.mxu0 0.0
  %59 = vmatpush1.msra.mxu0 0.0
  %60 = vmatprep.subr.mxu0 0.0
  %61 = vmatpush1.msra.mxu0 0.0
  %62 = vmatprep.subr.mxu0 0.0
  %63 = vmatpush1.msra.mxu0 0.0
  %64 = vmatprep.subr.mxu0 0.0
  %65 = vmatpush1.msra.mxu0 0.0
  %66 = vmatprep.subr.mxu0 0.0
  %67 = vmatpush1.msra.mxu0 0.0
  %68 = vmatprep.subr.mxu0 0.0
  %69 = vmatpush1.msra.mxu0 0.0
  %70 = vmatprep.subr.mxu0 0.0
  %71 = vmatpush1.msra.mxu0 0.0
  %72 = vmatprep.subr.mxu0 0.0
  %73 = vmatpush1.msra.mxu0 0.0
  %74 = vmatprep.subr.mxu0 0.0
  %75 = vmatpush1.msra.mxu0 0.0
  %76 = vmatprep.subr.mxu0 0.0
  %77 = vmatpush1.msra.mxu0 0.0
  %78 = vmatprep.subr.mxu0 0.0
  %79 = vmatpush1.msra.mxu0 0.0
  %80 = vmatprep.subr.mxu0 0.0
  %81 = vmatpush1.msra.mxu0 0.0
  %82 = vmatprep.subr.mxu0 0.0
  %83 = vmatpush1.msra.mxu0 0.0
  %84 = vmatprep.subr.mxu0 0.0
  %85 = vmatpush1.msra.mxu0 0.0
  %86 = vmatprep.subr.mxu0 0.0
  %87 = vmatpush1.msra.mxu0 0.0
  %88 = vmatprep.subr.mxu0 0.0
  %89 = vmatpush1.msra.mxu0 0.0
  %90 = vmatprep.subr.mxu0 0.0
  %91 = vmatpush1.msra.mxu0 0.0
  %92 = vmatprep.subr.mxu0 0.0
  %93 = vmatpush1.msra.mxu0 0.0
  %94 = vmatprep.subr.mxu0 0.0
  %95 = vmatpush1.msra.mxu0 0.0
  %96 = vmatprep.subr.mxu0 0.0
  %97 = vmatpush1.msra.mxu0 0.0
  %98 = vmatprep.subr.mxu0 0.0
  %99 = vmatpush1.msra.mxu0 0.0
  %100 = vmatprep.subr.mxu0 0.0
  %101 = vmatpush1.msra.mxu0 0.0
  %102 = vmatprep.mubr.f32.mxu0 0.0
  %103 = vmatmul.mubr.f32.gmra.mrb[0].mxu0 %v29
  %v104 = vpop.f32.mrb[0].mxu0
  %v105 = vadd.f32 %v25, %v104
  %v106 = vpop.f32.mrb[0].mxu0
  %107 = vmatprep.mubr.f32.mxu0 0.0
  %108 = vmatmul.mubr.f32.gmra.mrb[0].mxu0 %v32
  %v109 = vpop.f32.mrb[0].mxu0
  %v110 = vadd.f32 %v25, %v109
  %v111 = vpop.f32.mrb[0].mxu0
  %112 = vdwg.mxu0
  %v113 = vld [vmem:[%s2] sm:$0xff]
  %v114 = vld [vmem:[%s2 + $0x8] sm:$0xff]
  %v115 = vld [vmem:[%s2 + $0x10] sm:$0xff]
  %v116 = vld [vmem:[%s2 + $0x18] sm:$0xff]
  %vm117 = vcmask 261120
  %v119 = vsel %vm117, 0.0, 0
  %121 = vmatprep.subr.mxu0 0.0
  %122 = vmatpush1.msra.mxu0 %v113
  %123 = vmatprep.subr.mxu0 0.0
  %124 = vmatpush1.msra.mxu0 %v114
  %125 = vmatprep.subr.mxu0 0.0
  %126 = vmatpush1.msra.mxu0 %v115
  %127 = vmatprep.subr.mxu0 0.0
  %128 = vmatpush1.msra.mxu0 %v116
  %129 = vmatprep.subr.mxu0 0.0
  %130 = vmatpush1.msra.mxu0 0.0
  %131 = vmatprep.subr.mxu0 0.0
  %132 = vmatpush1.msra.mxu0 0.0
  %133 = vmatprep.subr.mxu0 0.0
  %134 = vmatpush1.msra.mxu0 0.0
  %135 = vmatprep.subr.mxu0 0.0
  %136 = vmatpush1.msra.mxu0 0.0
  %137 = vmatprep.subr.mxu0 0.0
  %138 = vmatpush1.msra.mxu0 0.0
  %139 = vmatprep.subr.mxu0 0.0
  %140 = vmatpush1.msra.mxu0 0.0
  %141 = vmatprep.subr.mxu0 0.0
  %142 = vmatpush1.msra.mxu0 0.0
  %143 = vmatprep.subr.mxu0 0.0
  %144 = vmatpush1.msra.mxu0 0.0
  %145 = vmatprep.subr.mxu0 0.0
  %146 = vmatpush1.msra.mxu0 0.0
  %147 = vmatprep.subr.mxu0 0.0
  %148 = vmatpush1.msra.mxu0 0.0
  %149 = vmatprep.subr.mxu0 0.0
  %150 = vmatpush1.msra.mxu0 0.0
  %151 = vmatprep.subr.mxu0 0.0
  %152 = vmatpush1.msra.mxu0 0.0
  %153 = vmatprep.subr.mxu0 0.0
  %154 = vmatpush1.msra.mxu0 0.0
  %155 = vmatprep.subr.mxu0 0.0
  %156 = vmatpush1.msra.mxu0 0.0
  %157 = vmatprep.subr.mxu0 0.0
  %158 = vmatpush1.msra.mxu0 0.0
  %159 = vmatprep.subr.mxu0 0.0
  %160 = vmatpush1.msra.mxu0 0.0
  %161 = vmatprep.subr.mxu0 0.0
  %162 = vmatpush1.msra.mxu0 0.0
  %163 = vmatprep.subr.mxu0 0.0
  %164 = vmatpush1.msra.mxu0 0.0
  %165 = vmatprep.subr.mxu0 0.0
  %166 = vmatpush1.msra.mxu0 0.0
  %167 = vmatprep.subr.mxu0 0.0
  %168 = vmatpush1.msra.mxu0 0.0
  %169 = vmatprep.subr.mxu0 0.0
  %170 = vmatpush1.msra.mxu0 0.0
  %171 = vmatprep.subr.mxu0 0.0
  %172 = vmatpush1.msra.mxu0 0.0
  %173 = vmatprep.subr.mxu0 0.0
  %174 = vmatpush1.msra.mxu0 0.0
  %175 = vmatprep.subr.mxu0 0.0
  %176 = vmatpush1.msra.mxu0 0.0
  %177 = vmatprep.subr.mxu0 0.0
  %178 = vmatpush1.msra.mxu0 0.0
  %179 = vmatprep.subr.mxu0 0.0
  %180 = vmatpush1.msra.mxu0 0.0
  %181 = vmatprep.subr.mxu0 0.0
  %182 = vmatpush1.msra.mxu0 0.0
  %183 = vmatprep.subr.mxu0 0.0
  %184 = vmatpush1.msra.mxu0 0.0
  %185 = vmatprep.mubr.f32.mxu0 0.0
  %186 = vmatmul.mubr.f32.gmra.mrb[0].mxu0 %v119
  %v187 = vpop.f32.mrb[0].mxu0
  %v188 = vadd.f32 0.0, %v187
  %v189 = vpop.f32.mrb[0].mxu0
  %190 = vdwg.mxu0
  %v191 = vadd.f32 %v105, %v188
  %v192 = vxor.u32 %v191, 2147483648
  %v193 = vmul.f32 %v192, 1.442695
  %v194 = vpow.pop %v193
  %v195 = vadd.f32 %v194, 1.0
  %v196 = vrcp.pop %v195
  %v197 = vmul.f32 1.0, %v196
  %v198 = vtanh.pop %v191
  %v199 = vmul.f32 %v197, 0.0
  %201 = vrot.lane.b32.xlu0 %v198, 64
  %v202 = vpop.permute.xlu0 %201
  %v204 = vmul.f32 %v197, %v202
  %206 = vrot.lane.b32.xlu0 %v204, 32
  %v207 = vpop.permute.xlu0 %206
  %v209 = vadd.f32 %v199, %v207
  %v210 = vtanh.pop %v209
  %212 = vrot.lane.b32.xlu0 %v210, 64
  %v213 = vpop.permute.xlu0 %212
  %v215 = vmul.f32 %v197, %v213
  %217 = vrot.lane.b32.xlu0 %v215, 32
  %v218 = vpop.permute.xlu0 %217
  %vm220 = vcmask 254976
  %221 = vst.msk [vmem:[%s4] sm:$0x3] %vm220, %v218
  %v222 = vsel %vm117, %v218, 0
  %224 = vmatprep.subr.mxu0 0.0
  %225 = vmatpush1.msra.mxu0 %v113
  %226 = vmatprep.subr.mxu0 0.0
  %227 = vmatpush1.msra.mxu0 %v114
  %228 = vmatprep.subr.mxu0 0.0
  %229 = vmatpush1.msra.mxu0 %v115
  %230 = vmatprep.subr.mxu0 0.0
  %231 = vmatpush1.msra.mxu0 %v116
  %232 = vmatprep.subr.mxu0 0.0
  %233 = vmatpush1.msra.mxu0 0.0
  %234 = vmatprep.subr.mxu0 0.0
  %235 = vmatpush1.msra.mxu0 0.0
  %236 = vmatprep.subr.mxu0 0.0
  %237 = vmatpush1.msra.mxu0 0.0
  %238 = vmatprep.subr.mxu0 0.0
  %239 = vmatpush1.msra.mxu0 0.0
  %240 = vmatprep.subr.mxu0 0.0
  %241 = vmatpush1.msra.mxu0 0.0
  %242 = vmatprep.subr.mxu0 0.0
  %243 = vmatpush1.msra.mxu0 0.0
  %244 = vmatprep.subr.mxu0 0.0
  %245 = vmatpush1.msra.mxu0 0.0
  %246 = vmatprep.subr.mxu0 0.0
  %247 = vmatpush1.msra.mxu0 0.0
  %248 = vmatprep.subr.mxu0 0.0
  %249 = vmatpush1.msra.mxu0 0.0
  %250 = vmatprep.subr.mxu0 0.0
  %251 = vmatpush1.msra.mxu0 0.0
  %252 = vmatprep.subr.mxu0 0.0
  %253 = vmatpush1.msra.mxu0 0.0
  %254 = vmatprep.subr.mxu0 0.0
  %255 = vmatpush1.msra.mxu0 0.0
  %256 = vmatprep.subr.mxu0 0.0
  %257 = vmatpush1.msra.mxu0 0.0
  %258 = vmatprep.subr.mxu0 0.0
  %259 = vmatpush1.msra.mxu0 0.0
  %260 = vmatprep.subr.mxu0 0.0
  %261 = vmatpush1.msra.mxu0 0.0
  %262 = vmatprep.subr.mxu0 0.0
  %263 = vmatpush1.msra.mxu0 0.0
  %264 = vmatprep.subr.mxu0 0.0
  %265 = vmatpush1.msra.mxu0 0.0
  %266 = vmatprep.subr.mxu0 0.0
  %267 = vmatpush1.msra.mxu0 0.0
  %268 = vmatprep.subr.mxu0 0.0
  %269 = vmatpush1.msra.mxu0 0.0
  %270 = vmatprep.subr.mxu0 0.0
  %271 = vmatpush1.msra.mxu0 0.0
  %272 = vmatprep.subr.mxu0 0.0
  %273 = vmatpush1.msra.mxu0 0.0
  %274 = vmatprep.subr.mxu0 0.0
  %275 = vmatpush1.msra.mxu0 0.0
  %276 = vmatprep.subr.mxu0 0.0
  %277 = vmatpush1.msra.mxu0 0.0
  %278 = vmatprep.subr.mxu0 0.0
  %279 = vmatpush1.msra.mxu0 0.0
  %280 = vmatprep.subr.mxu0 0.0
  %281 = vmatpush1.msra.mxu0 0.0
  %282 = vmatprep.subr.mxu0 0.0
  %283 = vmatpush1.msra.mxu0 0.0
  %284 = vmatprep.subr.mxu0 0.0
  %285 = vmatpush1.msra.mxu0 0.0
  %286 = vmatprep.subr.mxu0 0.0
  %287 = vmatpush1.msra.mxu0 0.0
  %288 = vmatprep.mubr.f32.mxu0 0.0
  %289 = vmatmul.mubr.f32.gmra.mrb[0].mxu0 %v222
  %v290 = vpop.f32.mrb[0].mxu0
  %v291 = vadd.f32 0.0, %v290
  %v292 = vpop.f32.mrb[0].mxu0
  %293 = vdwg.mxu0
  %v295 = vrot.slane %v291, 6
  %v297 = vadd.f32 %v105, %v295
  %v298 = vxor.u32 %v297, 2147483648
  %v299 = vmul.f32 %v298, 1.442695
  %v300 = vpow.pop %v299
  %v301 = vadd.f32 %v300, 1.0
  %v302 = vrcp.pop %v301
  %v303 = vmul.f32 1.0, %v302
  %v304 = vtanh.pop %v297
  %v306 = vrot.slane %v209, 6
  %v308 = vmul.f32 %v303, %v306
  %310 = vrot.lane.b32.xlu0 %v304, 64
  %v311 = vpop.permute.xlu0 %310
  %v313 = vmul.f32 %v303, %v311
  %315 = vrot.lane.b32.xlu0 %v313, 32
  %v316 = vpop.permute.xlu0 %315
  %v318 = vadd.f32 %v308, %v316
  %v319 = vtanh.pop %v318
  %321 = vrot.lane.b32.xlu0 %v319, 64
  %v322 = vpop.permute.xlu0 %321
  %v324 = vmul.f32 %v303, %v322
  %326 = vrot.lane.b32.xlu0 %v324, 32
  %v327 = vpop.permute.xlu0 %326
  %vm329 = vcmask 257026
  %330 = vst.msk [vmem:[%s4] sm:$0xc] %vm329, %v327
  %v331 = vrot.slane %v324, 2
  %332 = vrot.lane.b32.xlu0 %v331, 32
  %v333 = vpop.permute.xlu0 %332
  %v334 = vsel %vm117, %v333, 0
  %336 = vmatprep.subr.mxu0 0.0
  %337 = vmatpush1.msra.mxu0 %v113
  %338 = vmatprep.subr.mxu0 0.0
  %339 = vmatpush1.msra.mxu0 %v114
  %340 = vmatprep.subr.mxu0 0.0
  %341 = vmatpush1.msra.mxu0 %v115
  %342 = vmatprep.subr.mxu0 0.0
  %343 = vmatpush1.msra.mxu0 %v116
  %344 = vmatprep.subr.mxu0 0.0
  %345 = vmatpush1.msra.mxu0 0.0
  %346 = vmatprep.subr.mxu0 0.0
  %347 = vmatpush1.msra.mxu0 0.0
  %348 = vmatprep.subr.mxu0 0.0
  %349 = vmatpush1.msra.mxu0 0.0
  %350 = vmatprep.subr.mxu0 0.0
  %351 = vmatpush1.msra.mxu0 0.0
  %352 = vmatprep.subr.mxu0 0.0
  %353 = vmatpush1.msra.mxu0 0.0
  %354 = vmatprep.subr.mxu0 0.0
  %355 = vmatpush1.msra.mxu0 0.0
  %356 = vmatprep.subr.mxu0 0.0
  %357 = vmatpush1.msra.mxu0 0.0
  %358 = vmatprep.subr.mxu0 0.0
  %359 = vmatpush1.msra.mxu0 0.0
  %360 = vmatprep.subr.mxu0 0.0
  %361 = vmatpush1.msra.mxu0 0.0
  %362 = vmatprep.subr.mxu0 0.0
  %363 = vmatpush1.msra.mxu0 0.0
  %364 = vmatprep.subr.mxu0 0.0
  %365 = vmatpush1.msra.mxu0 0.0
  %366 = vmatprep.subr.mxu0 0.0
  %367 = vmatpush1.msra.mxu0 0.0
  %368 = vmatprep.subr.mxu0 0.0
  %369 = vmatpush1.msra.mxu0 0.0
  %370 = vmatprep.subr.mxu0 0.0
  %371 = vmatpush1.msra.mxu0 0.0
  %372 = vmatprep.subr.mxu0 0.0
  %373 = vmatpush1.msra.mxu0 0.0
  %374 = vmatprep.subr.mxu0 0.0
  %375 = vmatpush1.msra.mxu0 0.0
  %376 = vmatprep.subr.mxu0 0.0
  %377 = vmatpush1.msra.mxu0 0.0
  %378 = vmatprep.subr.mxu0 0.0
  %379 = vmatpush1.msra.mxu0 0.0
  %380 = vmatprep.subr.mxu0 0.0
  %381 = vmatpush1.msra.mxu0 0.0
  %382 = vmatprep.subr.mxu0 0.0
  %383 = vmatpush1.msra.mxu0 0.0
  %384 = vmatprep.subr.mxu0 0.0
  %385 = vmatpush1.msra.mxu0 0.0
  %386 = vmatprep.subr.mxu0 0.0
  %387 = vmatpush1.msra.mxu0 0.0
  %388 = vmatprep.subr.mxu0 0.0
  %389 = vmatpush1.msra.mxu0 0.0
  %390 = vmatprep.subr.mxu0 0.0
  %391 = vmatpush1.msra.mxu0 0.0
  %392 = vmatprep.subr.mxu0 0.0
  %393 = vmatpush1.msra.mxu0 0.0
  %394 = vmatprep.subr.mxu0 0.0
  %395 = vmatpush1.msra.mxu0 0.0
  %396 = vmatprep.subr.mxu0 0.0
  %397 = vmatpush1.msra.mxu0 0.0
  %398 = vmatprep.subr.mxu0 0.0
  %399 = vmatpush1.msra.mxu0 0.0
  %400 = vmatprep.mubr.f32.mxu0 0.0
  %401 = vmatmul.mubr.f32.gmra.mrb[0].mxu0 %v334
  %v402 = vpop.f32.mrb[0].mxu0
  %v403 = vadd.f32 0.0, %v402
  %v404 = vpop.f32.mrb[0].mxu0
  %405 = vdwg.mxu0
  %v407 = vrot.slane %v403, 4
  %v409 = vadd.f32 %v105, %v407
  %v410 = vxor.u32 %v409, 2147483648
  %v411 = vmul.f32 %v410, 1.442695
  %v412 = vpow.pop %v411
  %v413 = vadd.f32 %v412, 1.0
  %v414 = vrcp.pop %v413
  %v415 = vmul.f32 1.0, %v414
  %v416 = vtanh.pop %v409
  %v418 = vrot.slane %v318, 6
  %v420 = vmul.f32 %v415, %v418
  %422 = vrot.lane.b32.xlu0 %v416, 64
  %v423 = vpop.permute.xlu0 %422
  %v425 = vmul.f32 %v415, %v423
  %427 = vrot.lane.b32.xlu0 %v425, 32
  %v428 = vpop.permute.xlu0 %427
  %v430 = vadd.f32 %v420, %v428
  %v431 = vtanh.pop %v430
  %433 = vrot.lane.b32.xlu0 %v431, 64
  %v434 = vpop.permute.xlu0 %433
  %v436 = vmul.f32 %v415, %v434
  %438 = vrot.lane.b32.xlu0 %v436, 32
  %v439 = vpop.permute.xlu0 %438
  %vm441 = vcmask 259076
  %442 = vst.msk [vmem:[%s4] sm:$0x30] %vm441, %v439
  %v443 = vrot.slane %v436, 4
  %444 = vrot.lane.b32.xlu0 %v443, 32
  %v445 = vpop.permute.xlu0 %444
  %v446 = vsel %vm117, %v445, 0
  %448 = vmatprep.subr.mxu0 0.0
  %449 = vmatpush1.msra.mxu0 %v113
  %450 = vmatprep.subr.mxu0 0.0
  %451 = vmatpush1.msra.mxu0 %v114
  %452 = vmatprep.subr.mxu0 0.0
  %453 = vmatpush1.msra.mxu0 %v115
  %454 = vmatprep.subr.mxu0 0.0
  %455 = vmatpush1.msra.mxu0 %v116
  %456 = vmatprep.subr.mxu0 0.0
  %457 = vmatpush1.msra.mxu0 0.0
  %458 = vmatprep.subr.mxu0 0.0
  %459 = vmatpush1.msra.mxu0 0.0
  %460 = vmatprep.subr.mxu0 0.0
  %461 = vmatpush1.msra.mxu0 0.0
  %462 = vmatprep.subr.mxu0 0.0
  %463 = vmatpush1.msra.mxu0 0.0
  %464 = vmatprep.subr.mxu0 0.0
  %465 = vmatpush1.msra.mxu0 0.0
  %466 = vmatprep.subr.mxu0 0.0
  %467 = vmatpush1.msra.mxu0 0.0
  %468 = vmatprep.subr.mxu0 0.0
  %469 = vmatpush1.msra.mxu0 0.0
  %470 = vmatprep.subr.mxu0 0.0
  %471 = vmatpush1.msra.mxu0 0.0
  %472 = vmatprep.subr.mxu0 0.0
  %473 = vmatpush1.msra.mxu0 0.0
  %474 = vmatprep.subr.mxu0 0.0
  %475 = vmatpush1.msra.mxu0 0.0
  %476 = vmatprep.subr.mxu0 0.0
  %477 = vmatpush1.msra.mxu0 0.0
  %478 = vmatprep.subr.mxu0 0.0
  %479 = vmatpush1.msra.mxu0 0.0
  %480 = vmatprep.subr.mxu0 0.0
  %481 = vmatpush1.msra.mxu0 0.0
  %482 = vmatprep.subr.mxu0 0.0
  %483 = vmatpush1.msra.mxu0 0.0
  %484 = vmatprep.subr.mxu0 0.0
  %485 = vmatpush1.msra.mxu0 0.0
  %486 = vmatprep.subr.mxu0 0.0
  %487 = vmatpush1.msra.mxu0 0.0
  %488 = vmatprep.subr.mxu0 0.0
  %489 = vmatpush1.msra.mxu0 0.0
  %490 = vmatprep.subr.mxu0 0.0
  %491 = vmatpush1.msra.mxu0 0.0
  %492 = vmatprep.subr.mxu0 0.0
  %493 = vmatpush1.msra.mxu0 0.0
  %494 = vmatprep.subr.mxu0 0.0
  %495 = vmatpush1.msra.mxu0 0.0
  %496 = vmatprep.subr.mxu0 0.0
  %497 = vmatpush1.msra.mxu0 0.0
  %498 = vmatprep.subr.mxu0 0.0
  %499 = vmatpush1.msra.mxu0 0.0
  %500 = vmatprep.subr.mxu0 0.0
  %501 = vmatpush1.msra.mxu0 0.0
  %502 = vmatprep.subr.mxu0 0.0
  %503 = vmatpush1.msra.mxu0 0.0
  %504 = vmatprep.subr.mxu0 0.0
  %505 = vmatpush1.msra.mxu0 0.0
  %506 = vmatprep.subr.mxu0 0.0
  %507 = vmatpush1.msra.mxu0 0.0
  %508 = vmatprep.subr.mxu0 0.0
  %509 = vmatpush1.msra.mxu0 0.0
  %510 = vmatprep.subr.mxu0 0.0
  %511 = vmatpush1.msra.mxu0 0.0
  %512 = vmatprep.mubr.f32.mxu0 0.0
  %513 = vmatmul.mubr.f32.gmra.mrb[0].mxu0 %v446
  %v514 = vpop.f32.mrb[0].mxu0
  %v515 = vadd.f32 0.0, %v514
  %v516 = vpop.f32.mrb[0].mxu0
  %517 = vdwg.mxu0
  %v519 = vrot.slane %v515, 2
  %v521 = vadd.f32 %v105, %v519
  %v522 = vxor.u32 %v521, 2147483648
  %v523 = vmul.f32 %v522, 1.442695
  %v524 = vpow.pop %v523
  %v525 = vadd.f32 %v524, 1.0
  %v526 = vrcp.pop %v525
  %v527 = vmul.f32 1.0, %v526
  %v528 = vtanh.pop %v521
  %v530 = vrot.slane %v430, 6
  %v532 = vmul.f32 %v527, %v530
  %534 = vrot.lane.b32.xlu0 %v528, 64
  %v535 = vpop.permute.xlu0 %534
  %v537 = vmul.f32 %v527, %v535
  %539 = vrot.lane.b32.xlu0 %v537, 32
  %v540 = vpop.permute.xlu0 %539
  %v542 = vadd.f32 %v532, %v540
  %v543 = vtanh.pop %v542
  %545 = vrot.lane.b32.xlu0 %v543, 64
  %v546 = vpop.permute.xlu0 %545
  %v548 = vmul.f32 %v527, %v546
  %550 = vrot.lane.b32.xlu0 %v548, 32
  %v551 = vpop.permute.xlu0 %550
  %vm553 = vcmask 261126
  %554 = vst.msk [vmem:[%s4] sm:$0xc0] %vm553, %v551
  %v555 = vrot.slane %v548, 6
  %556 = vrot.lane.b32.xlu0 %v555, 32
  %v557 = vpop.permute.xlu0 %556
  %v558 = vsel %vm117, %v557, 0
  %560 = vmatprep.subr.mxu0 0.0
  %561 = vmatpush1.msra.mxu0 %v113
  %562 = vmatprep.subr.mxu0 0.0
  %563 = vmatpush1.msra.mxu0 %v114
  %564 = vmatprep.subr.mxu0 0.0
  %565 = vmatpush1.msra.mxu0 %v115
  %566 = vmatprep.subr.mxu0 0.0
  %567 = vmatpush1.msra.mxu0 %v116
  %568 = vmatprep.subr.mxu0 0.0
  %569 = vmatpush1.msra.mxu0 0.0
  %570 = vmatprep.subr.mxu0 0.0
  %571 = vmatpush1.msra.mxu0 0.0
  %572 = vmatprep.subr.mxu0 0.0
  %573 = vmatpush1.msra.mxu0 0.0
  %574 = vmatprep.subr.mxu0 0.0
  %575 = vmatpush1.msra.mxu0 0.0
  %576 = vmatprep.subr.mxu0 0.0
  %577 = vmatpush1.msra.mxu0 0.0
  %578 = vmatprep.subr.mxu0 0.0
  %579 = vmatpush1.msra.mxu0 0.0
  %580 = vmatprep.subr.mxu0 0.0
  %581 = vmatpush1.msra.mxu0 0.0
  %582 = vmatprep.subr.mxu0 0.0
  %583 = vmatpush1.msra.mxu0 0.0
  %584 = vmatprep.subr.mxu0 0.0
  %585 = vmatpush1.msra.mxu0 0.0
  %586 = vmatprep.subr.mxu0 0.0
  %587 = vmatpush1.msra.mxu0 0.0
  %588 = vmatprep.subr.mxu0 0.0
  %589 = vmatpush1.msra.mxu0 0.0
  %590 = vmatprep.subr.mxu0 0.0
  %591 = vmatpush1.msra.mxu0 0.0
  %592 = vmatprep.subr.mxu0 0.0
  %593 = vmatpush1.msra.mxu0 0.0
  %594 = vmatprep.subr.mxu0 0.0
  %595 = vmatpush1.msra.mxu0 0.0
  %596 = vmatprep.subr.mxu0 0.0
  %597 = vmatpush1.msra.mxu0 0.0
  %598 = vmatprep.subr.mxu0 0.0
  %599 = vmatpush1.msra.mxu0 0.0
  %600 = vmatprep.subr.mxu0 0.0
  %601 = vmatpush1.msra.mxu0 0.0
  %602 = vmatprep.subr.mxu0 0.0
  %603 = vmatpush1.msra.mxu0 0.0
  %604 = vmatprep.subr.mxu0 0.0
  %605 = vmatpush1.msra.mxu0 0.0
  %606 = vmatprep.subr.mxu0 0.0
  %607 = vmatpush1.msra.mxu0 0.0
  %608 = vmatprep.subr.mxu0 0.0
  %609 = vmatpush1.msra.mxu0 0.0
  %610 = vmatprep.subr.mxu0 0.0
  %611 = vmatpush1.msra.mxu0 0.0
  %612 = vmatprep.subr.mxu0 0.0
  %613 = vmatpush1.msra.mxu0 0.0
  %614 = vmatprep.subr.mxu0 0.0
  %615 = vmatpush1.msra.mxu0 0.0
  %616 = vmatprep.subr.mxu0 0.0
  %617 = vmatpush1.msra.mxu0 0.0
  %618 = vmatprep.subr.mxu0 0.0
  %619 = vmatpush1.msra.mxu0 0.0
  %620 = vmatprep.subr.mxu0 0.0
  %621 = vmatpush1.msra.mxu0 0.0
  %622 = vmatprep.subr.mxu0 0.0
  %623 = vmatpush1.msra.mxu0 0.0
  %624 = vmatprep.mubr.f32.mxu0 0.0
  %625 = vmatmul.mubr.f32.gmra.mrb[0].mxu0 %v558
  %v626 = vpop.f32.mrb[0].mxu0
  %v627 = vadd.f32 0.0, %v626
  %v628 = vpop.f32.mrb[0].mxu0
  %629 = vdwg.mxu0
  %v630 = vadd.f32 %v110, %v627
  %v631 = vxor.u32 %v630, 2147483648
  %v632 = vmul.f32 %v631, 1.442695
  %v633 = vpow.pop %v632
  %v634 = vadd.f32 %v633, 1.0
  %v635 = vrcp.pop %v634
  %v636 = vmul.f32 1.0, %v635
  %v637 = vtanh.pop %v630
  %v639 = vrot.slane %v542, 6
  %v641 = vmul.f32 %v636, %v639
  %643 = vrot.lane.b32.xlu0 %v637, 64
  %v644 = vpop.permute.xlu0 %643
  %v646 = vmul.f32 %v636, %v644
  %648 = vrot.lane.b32.xlu0 %v646, 32
  %v649 = vpop.permute.xlu0 %648
  %v651 = vadd.f32 %v641, %v649
  %v652 = vtanh.pop %v651
  %654 = vrot.lane.b32.xlu0 %v652, 64
  %v655 = vpop.permute.xlu0 %654
  %v657 = vmul.f32 %v636, %v655
  %659 = vrot.lane.b32.xlu0 %v657, 32
  %v660 = vpop.permute.xlu0 %659
  %662 = vst.msk [vmem:[%s4 + $0x8] sm:$0x3] %vm220, %v660
  %v663 = vsel %vm117, %v660, 0
  %665 = vmatprep.subr.mxu0 0.0
  %666 = vmatpush1.msra.mxu0 %v113
  %667 = vmatprep.subr.mxu0 0.0
  %668 = vmatpush1.msra.mxu0 %v114
  %669 = vmatprep.subr.mxu0 0.0
  %670 = vmatpush1.msra.mxu0 %v115
  %671 = vmatprep.subr.mxu0 0.0
  %672 = vmatpush1.msra.mxu0 %v116
  %673 = vmatprep.subr.mxu0 0.0
  %674 = vmatpush1.msra.mxu0 0.0
  %675 = vmatprep.subr.mxu0 0.0
  %676 = vmatpush1.msra.mxu0 0.0
  %677 = vmatprep.subr.mxu0 0.0
  %678 = vmatpush1.msra.mxu0 0.0
  %679 = vmatprep.subr.mxu0 0.0
  %680 = vmatpush1.msra.mxu0 0.0
  %681 = vmatprep.subr.mxu0 0.0
  %682 = vmatpush1.msra.mxu0 0.0
  %683 = vmatprep.subr.mxu0 0.0
  %684 = vmatpush1.msra.mxu0 0.0
  %685 = vmatprep.subr.mxu0 0.0
  %686 = vmatpush1.msra.mxu0 0.0
  %687 = vmatprep.subr.mxu0 0.0
  %688 = vmatpush1.msra.mxu0 0.0
  %689 = vmatprep.subr.mxu0 0.0
  %690 = vmatpush1.msra.mxu0 0.0
  %691 = vmatprep.subr.mxu0 0.0
  %692 = vmatpush1.msra.mxu0 0.0
  %693 = vmatprep.subr.mxu0 0.0
  %694 = vmatpush1.msra.mxu0 0.0
  %695 = vmatprep.subr.mxu0 0.0
  %696 = vmatpush1.msra.mxu0 0.0
  %697 = vmatprep.subr.mxu0 0.0
  %698 = vmatpush1.msra.mxu0 0.0
  %699 = vmatprep.subr.mxu0 0.0
  %700 = vmatpush1.msra.mxu0 0.0
  %701 = vmatprep.subr.mxu0 0.0
  %702 = vmatpush1.msra.mxu0 0.0
  %703 = vmatprep.subr.mxu0 0.0
  %704 = vmatpush1.msra.mxu0 0.0
  %705 = vmatprep.subr.mxu0 0.0
  %706 = vmatpush1.msra.mxu0 0.0
  %707 = vmatprep.subr.mxu0 0.0
  %708 = vmatpush1.msra.mxu0 0.0
  %709 = vmatprep.subr.mxu0 0.0
  %710 = vmatpush1.msra.mxu0 0.0
  %711 = vmatprep.subr.mxu0 0.0
  %712 = vmatpush1.msra.mxu0 0.0
  %713 = vmatprep.subr.mxu0 0.0
  %714 = vmatpush1.msra.mxu0 0.0
  %715 = vmatprep.subr.mxu0 0.0
  %716 = vmatpush1.msra.mxu0 0.0
  %717 = vmatprep.subr.mxu0 0.0
  %718 = vmatpush1.msra.mxu0 0.0
  %719 = vmatprep.subr.mxu0 0.0
  %720 = vmatpush1.msra.mxu0 0.0
  %721 = vmatprep.subr.mxu0 0.0
  %722 = vmatpush1.msra.mxu0 0.0
  %723 = vmatprep.subr.mxu0 0.0
  %724 = vmatpush1.msra.mxu0 0.0
  %725 = vmatprep.subr.mxu0 0.0
  %726 = vmatpush1.msra.mxu0 0.0
  %727 = vmatprep.subr.mxu0 0.0
  %728 = vmatpush1.msra.mxu0 0.0
  %729 = vmatprep.mubr.f32.mxu0 0.0
  %730 = vmatmul.mubr.f32.gmra.mrb[0].mxu0 %v663
  %v731 = vpop.f32.mrb[0].mxu0
  %v732 = vadd.f32 0.0, %v731
  %v733 = vpop.f32.mrb[0].mxu0
  %734 = vdwg.mxu0
  %v736 = vrot.slane %v732, 6
  %v738 = vadd.f32 %v110, %v736
  %v739 = vxor.u32 %v738, 2147483648
  %v740 = vmul.f32 %v739, 1.442695
  %v741 = vpow.pop %v740
  %v742 = vadd.f32 %v741, 1.0
  %v743 = vrcp.pop %v742
  %v744 = vmul.f32 1.0, %v743
  %v745 = vtanh.pop %v738
  %v747 = vrot.slane %v651, 6
  %v749 = vmul.f32 %v744, %v747
  %751 = vrot.lane.b32.xlu0 %v745, 64
  %v752 = vpop.permute.xlu0 %751
  %v754 = vmul.f32 %v744, %v752
  %756 = vrot.lane.b32.xlu0 %v754, 32
  %v757 = vpop.permute.xlu0 %756
  %v759 = vadd.f32 %v749, %v757
  %v760 = vtanh.pop %v759
  %762 = vrot.lane.b32.xlu0 %v760, 64
  %v763 = vpop.permute.xlu0 %762
  %v765 = vmul.f32 %v744, %v763
  %767 = vrot.lane.b32.xlu0 %v765, 32
  %v768 = vpop.permute.xlu0 %767
  %770 = vst.msk [vmem:[%s4 + $0x8] sm:$0xc] %vm329, %v768
  %v771 = vrot.slane %v765, 2
  %772 = vrot.lane.b32.xlu0 %v771, 32
  %v773 = vpop.permute.xlu0 %772
  %v774 = vsel %vm117, %v773, 0
  %776 = vmatprep.subr.mxu0 0.0
  %777 = vmatpush1.msra.mxu0 %v113
  %778 = vmatprep.subr.mxu0 0.0
  %779 = vmatpush1.msra.mxu0 %v114
  %780 = vmatprep.subr.mxu0 0.0
  %781 = vmatpush1.msra.mxu0 %v115
  %782 = vmatprep.subr.mxu0 0.0
  %783 = vmatpush1.msra.mxu0 %v116
  %784 = vmatprep.subr.mxu0 0.0
  %785 = vmatpush1.msra.mxu0 0.0
  %786 = vmatprep.subr.mxu0 0.0
  %787 = vmatpush1.msra.mxu0 0.0
  %788 = vmatprep.subr.mxu0 0.0
  %789 = vmatpush1.msra.mxu0 0.0
  %790 = vmatprep.subr.mxu0 0.0
  %791 = vmatpush1.msra.mxu0 0.0
  %792 = vmatprep.subr.mxu0 0.0
  %793 = vmatpush1.msra.mxu0 0.0
  %794 = vmatprep.subr.mxu0 0.0
  %795 = vmatpush1.msra.mxu0 0.0
  %796 = vmatprep.subr.mxu0 0.0
  %797 = vmatpush1.msra.mxu0 0.0
  %798 = vmatprep.subr.mxu0 0.0
  %799 = vmatpush1.msra.mxu0 0.0
  %800 = vmatprep.subr.mxu0 0.0
  %801 = vmatpush1.msra.mxu0 0.0
  %802 = vmatprep.subr.mxu0 0.0
  %803 = vmatpush1.msra.mxu0 0.0
  %804 = vmatprep.subr.mxu0 0.0
  %805 = vmatpush1.msra.mxu0 0.0
  %806 = vmatprep.subr.mxu0 0.0
  %807 = vmatpush1.msra.mxu0 0.0
  %808 = vmatprep.subr.mxu0 0.0
  %809 = vmatpush1.msra.mxu0 0.0
  %810 = vmatprep.subr.mxu0 0.0
  %811 = vmatpush1.msra.mxu0 0.0
  %812 = vmatprep.subr.mxu0 0.0
  %813 = vmatpush1.msra.mxu0 0.0
  %814 = vmatprep.subr.mxu0 0.0
  %815 = vmatpush1.msra.mxu0 0.0
  %816 = vmatprep.subr.mxu0 0.0
  %817 = vmatpush1.msra.mxu0 0.0
  %818 = vmatprep.subr.mxu0 0.0
  %819 = vmatpush1.msra.mxu0 0.0
  %820 = vmatprep.subr.mxu0 0.0
  %821 = vmatpush1.msra.mxu0 0.0
  %822 = vmatprep.subr.mxu0 0.0
  %823 = vmatpush1.msra.mxu0 0.0
  %824 = vmatprep.subr.mxu0 0.0
  %825 = vmatpush1.msra.mxu0 0.0
  %826 = vmatprep.subr.mxu0 0.0
  %827 = vmatpush1.msra.mxu0 0.0
  %828 = vmatprep.subr.mxu0 0.0
  %829 = vmatpush1.msra.mxu0 0.0
  %830 = vmatprep.subr.mxu0 0.0
  %831 = vmatpush1.msra.mxu0 0.0
  %832 = vmatprep.subr.mxu0 0.0
  %833 = vmatpush1.msra.mxu0 0.0
  %834 = vmatprep.subr.mxu0 0.0
  %835 = vmatpush1.msra.mxu0 0.0
  %836 = vmatprep.subr.mxu0 0.0
  %837 = vmatpush1.msra.mxu0 0.0
  %838 = vmatprep.subr.mxu0 0.0
  %839 = vmatpush1.msra.mxu0 0.0
  %840 = vmatprep.mubr.f32.mxu0 0.0
  %841 = vmatmul.mubr.f32.gmra.mrb[0].mxu0 %v774
  %v842 = vpop.f32.mrb[0].mxu0
  %v843 = vadd.f32 0.0, %v842
  %v844 = vpop.f32.mrb[0].mxu0
  %845 = vdwg.mxu0
  %v847 = vrot.slane %v843, 4
  %v849 = vadd.f32 %v110, %v847
  %v850 = vxor.u32 %v849, 2147483648
  %v851 = vmul.f32 %v850, 1.442695
  %v852 = vpow.pop %v851
  %v853 = vadd.f32 %v852, 1.0
  %v854 = vrcp.pop %v853
  %v855 = vmul.f32 1.0, %v854
  %v856 = vtanh.pop %v849
  %v858 = vrot.slane %v759, 6
  %v860 = vmul.f32 %v855, %v858
  %862 = vrot.lane.b32.xlu0 %v856, 64
  %v863 = vpop.permute.xlu0 %862
  %v865 = vmul.f32 %v855, %v863
  %867 = vrot.lane.b32.xlu0 %v865, 32
  %v868 = vpop.permute.xlu0 %867
  %v870 = vadd.f32 %v860, %v868
  %v871 = vtanh.pop %v870
  %873 = vrot.lane.b32.xlu0 %v871, 64
  %v874 = vpop.permute.xlu0 %873
  %v876 = vmul.f32 %v855, %v874
  %878 = vrot.lane.b32.xlu0 %v876, 32
  %v879 = vpop.permute.xlu0 %878
  %881 = vst.msk [vmem:[%s4 + $0x8] sm:$0x30] %vm441, %v879
  %v882 = vrot.slane %v876, 4
  %883 = vrot.lane.b32.xlu0 %v882, 32
  %v884 = vpop.permute.xlu0 %883
  %v885 = vsel %vm117, %v884, 0
  %887 = vmatprep.subr.mxu0 0.0
  %888 = vmatpush1.msra.mxu0 %v113
  %889 = vmatprep.subr.mxu0 0.0
  %890 = vmatpush1.msra.mxu0 %v114
  %891 = vmatprep.subr.mxu0 0.0
  %892 = vmatpush1.msra.mxu0 %v115
  %893 = vmatprep.subr.mxu0 0.0
  %894 = vmatpush1.msra.mxu0 %v116
  %895 = vmatprep.subr.mxu0 0.0
  %896 = vmatpush1.msra.mxu0 0.0
  %897 = vmatprep.subr.mxu0 0.0
  %898 = vmatpush1.msra.mxu0 0.0
  %899 = vmatprep.subr.mxu0 0.0
  %900 = vmatpush1.msra.mxu0 0.0
  %901 = vmatprep.subr.mxu0 0.0
  %902 = vmatpush1.msra.mxu0 0.0
  %903 = vmatprep.subr.mxu0 0.0
  %904 = vmatpush1.msra.mxu0 0.0
  %905 = vmatprep.subr.mxu0 0.0
  %906 = vmatpush1.msra.mxu0 0.0
  %907 = vmatprep.subr.mxu0 0.0
  %908 = vmatpush1.msra.mxu0 0.0
  %909 = vmatprep.subr.mxu0 0.0
  %910 = vmatpush1.msra.mxu0 0.0
  %911 = vmatprep.subr.mxu0 0.0
  %912 = vmatpush1.msra.mxu0 0.0
  %913 = vmatprep.subr.mxu0 0.0
  %914 = vmatpush1.msra.mxu0 0.0
  %915 = vmatprep.subr.mxu0 0.0
  %916 = vmatpush1.msra.mxu0 0.0
  %917 = vmatprep.subr.mxu0 0.0
  %918 = vmatpush1.msra.mxu0 0.0
  %919 = vmatprep.subr.mxu0 0.0
  %920 = vmatpush1.msra.mxu0 0.0
  %921 = vmatprep.subr.mxu0 0.0
  %922 = vmatpush1.msra.mxu0 0.0
  %923 = vmatprep.subr.mxu0 0.0
  %924 = vmatpush1.msra.mxu0 0.0
  %925 = vmatprep.subr.mxu0 0.0
  %926 = vmatpush1.msra.mxu0 0.0
  %927 = vmatprep.subr.mxu0 0.0
  %928 = vmatpush1.msra.mxu0 0.0
  %929 = vmatprep.subr.mxu0 0.0
  %930 = vmatpush1.msra.mxu0 0.0
  %931 = vmatprep.subr.mxu0 0.0
  %932 = vmatpush1.msra.mxu0 0.0
  %933 = vmatprep.subr.mxu0 0.0
  %934 = vmatpush1.msra.mxu0 0.0
  %935 = vmatprep.subr.mxu0 0.0
  %936 = vmatpush1.msra.mxu0 0.0
  %937 = vmatprep.subr.mxu0 0.0
  %938 = vmatpush1.msra.mxu0 0.0
  %939 = vmatprep.subr.mxu0 0.0
  %940 = vmatpush1.msra.mxu0 0.0
  %941 = vmatprep.subr.mxu0 0.0
  %942 = vmatpush1.msra.mxu0 0.0
  %943 = vmatprep.subr.mxu0 0.0
  %944 = vmatpush1.msra.mxu0 0.0
  %945 = vmatprep.subr.mxu0 0.0
  %946 = vmatpush1.msra.mxu0 0.0
  %947 = vmatprep.subr.mxu0 0.0
  %948 = vmatpush1.msra.mxu0 0.0
  %949 = vmatprep.subr.mxu0 0.0
  %950 = vmatpush1.msra.mxu0 0.0
  %951 = vmatprep.mubr.f32.mxu0 0.0
  %952 = vmatmul.mubr.f32.gmra.mrb[0].mxu0 %v885
  %v953 = vpop.f32.mrb[0].mxu0
  %v954 = vadd.f32 0.0, %v953
  %v955 = vpop.f32.mrb[0].mxu0
  %956 = vdwg.mxu0
  %v958 = vrot.slane %v954, 2
  %v960 = vadd.f32 %v110, %v958
  %v961 = vxor.u32 %v960, 2147483648
  %v962 = vmul.f32 %v961, 1.442695
  %v963 = vpow.pop %v962
  %v964 = vadd.f32 %v963, 1.0
  %v965 = vrcp.pop %v964
  %v966 = vmul.f32 1.0, %v965
  %v967 = vtanh.pop %v960
  %v969 = vrot.slane %v870, 6
  %v971 = vmul.f32 %v966, %v969
  %973 = vrot.lane.b32.xlu0 %v967, 64
  %v974 = vpop.permute.xlu0 %973
  %v976 = vmul.f32 %v966, %v974
  %978 = vrot.lane.b32.xlu0 %v976, 32
  %v979 = vpop.permute.xlu0 %978
  %v981 = vadd.f32 %v971, %v979
  %v982 = vtanh.pop %v981
  %984 = vrot.lane.b32.xlu0 %v982, 64
  %v985 = vpop.permute.xlu0 %984
  %v987 = vmul.f32 %v966, %v985
  %989 = vrot.lane.b32.xlu0 %v987, 32
  %v990 = vpop.permute.xlu0 %989
  %992 = vst.msk [vmem:[%s4 + $0x8] sm:$0xc0] %vm553, %v990
  // Predicated region
  $region18: #{lstm_model_forward.2} parent=0 // pred_check
    _
  $region19: #{lstm_model_forward.2} parent=0 // pred_check_branch
    %994 = sbr.rel (0) target = $region21
  $region20: #{lstm_model_forward.2} parent=0 // pred_region
    _
  $region21: #{lstm_model_forward.2} parent=0 // pred_fallthru
    _
  // Predicated region
  $region22: #{lstm_model_forward.2} parent=0 // pred_check
    _
  $region23: #{lstm_model_forward.2} parent=0 // pred_check_branch
    %996 = sbr.rel (0) target = $region25
  $region24: #{lstm_model_forward.2} parent=0 // pred_region
    _
  $region25: #{lstm_model_forward.2} parent=0 // pred_fallthru
    _

// kernel: lstm_model_forward.3
$region0: #{lstm_model_forward.3}
  #allocation0 [shape = 'u32[]', space=smem, size = 0x4, offset = 0x4, fixed_abs, tag = 'smem constant byte address 0x4 - core index']
  #allocation1 [shape = 'u32[144,128]{1,0:T(1,128)}', space=vmem, size = 0x12000, scoped, tag = 'internal scratch']
  %s0 = inlined_call_operand.vmem [shape: f32[16,32], index: 0, kind: input, shape index: {}]
  %s1 = inlined_call_operand.vmem [shape: f32[32,128], index: 1, kind: input, shape index: {}]
  %s2 = inlined_call_operand.vmem [shape: f32[32,128], index: 2, kind: input, shape index: {}]
  %s3 = inlined_call_operand.vmem [shape: f32[1,128], index: 3, kind: input, shape index: {}]
  %s4 = inlined_call_operand.vmem [shape: f32[32,3], index: 4, kind: input, shape index: {}]
  %s5 = inlined_call_operand.vmem [shape: f32[1,3], index: 5, kind: input, shape index: {}]
  %s6 = inlined_call_operand.hbm [shape: f32[2,3], index: 6, kind: output, shape index: {}]
  %s7 = sld [smem:[#allocation0]]
  $region34: #{lstm_model_forward.3} parent=0
    _
  %s9 = ssub.s32 1, %s7
  %s10 = scalar_select 0, %s9, %s7
  $region1: #{lstm_model_forward.3} parent=0
    #allocation2 [shape = 'u8[1024]{0}', space=vmem, size = 0x400, scoped, tag = 'output window, operand 0, single buffered']
    #allocation3 [shape = 's32[1]{0}', space=sflag, size = 0x4, scoped, tag = 'scoped memory for lstm_model_forward.3']
    %11 = vsyncpa [#allocation3], 0
    // Predicated region
    $region2: #{lstm_model_forward.3} parent=1 // pred_check
      _
    $region3: #{lstm_model_forward.3} parent=1 // pred_check_branch
      %13 = sbr.rel (0) target = $region5
    $region4: #{lstm_model_forward.3} parent=1 // pred_region
      _
    $region5: #{lstm_model_forward.3} parent=1 // pred_fallthru
      _
    // Predicated region
    $region6: #{lstm_model_forward.3} parent=1 // pred_check
      _
    $region7: #{lstm_model_forward.3} parent=1 // pred_check_branch
      %15 = sbr.rel (0) target = $region9
    $region8: #{lstm_model_forward.3} parent=1 // pred_region
      _
    $region9: #{lstm_model_forward.3} parent=1 // pred_fallthru
      _
    // Predicated region
    $region10: #{lstm_model_forward.3} parent=1 // pred_check
      _
    $region11: #{lstm_model_forward.3} parent=1 // pred_check_branch
      %17 = sbr.rel (0) target = $region13
    $region12: #{lstm_model_forward.3} parent=1 // pred_region
      _
    $region13: #{lstm_model_forward.3} parent=1 // pred_fallthru
      _
    // Predicated region
    $region14: #{lstm_model_forward.3} parent=1 // pred_check
      _
    $region15: #{lstm_model_forward.3} parent=1 // pred_check_branch
      %19 = sbr.rel (0) target = $region17
    $region16: #{lstm_model_forward.3} parent=1 // pred_region
      _
    $region17: #{lstm_model_forward.3} parent=1 // pred_fallthru
      _
    // Predicated region
    $region18: #{lstm_model_forward.3} parent=1 // pred_check
      _
    $region19: #{lstm_model_forward.3} parent=1 // pred_check_branch
      %21 = sbr.rel (0) target = $region21
    $region20: #{lstm_model_forward.3} parent=1 // pred_region
      _
    $region21: #{lstm_model_forward.3} parent=1 // pred_fallthru
      _
    // Predicated region
    $region22: #{lstm_model_forward.3} parent=1 // pred_check
      _
    $region23: #{lstm_model_forward.3} parent=1 // pred_check_branch
      %23 = sbr.rel (0) target = $region25
    $region24: #{lstm_model_forward.3} parent=1 // pred_region
      _
    $region25: #{lstm_model_forward.3} parent=1 // pred_fallthru
      _
    %v24 = vld [vmem:[%s0] sm:$0xff]
    %v25 = vld [vmem:[%s0 + $0x8] sm:$0xff]
    %v26 = vld [vmem:[%s1] sm:$0xff]
    %v27 = vld [vmem:[%s1 + $0x8] sm:$0xff]
    %v28 = vld [vmem:[%s1 + $0x10] sm:$0xff]
    %v29 = vld [vmem:[%s1 + $0x18] sm:$0xff]
    %v30 = vld [vmem:[%s3] sm:$0x1]
    %v32 = vlaneseq
    %v33 = vshrl.u32 %v32, 7
    %v34 = vsub.s32 0, %v33
    %v35 = vrot.slane %v30, %v34
    %vm37 = vcmask 261120
    %v39 = vsel %vm37, %v24, 0
    %v42 = vsel %vm37, %v25, 0
    %44 = vmatprep.subr.mxu0 0.0
    %45 = vmatpush1.msra.mxu0 %v26
    %46 = vmatprep.subr.mxu0 0.0
    %47 = vmatpush1.msra.mxu0 %v27
    %48 = vmatprep.subr.mxu0 0.0
    %49 = vmatpush1.msra.mxu0 %v28
    %50 = vmatprep.subr.mxu0 0.0
    %51 = vmatpush1.msra.mxu0 %v29
    %52 = vmatprep.subr.mxu0 0.0
    %53 = vmatpush1.msra.mxu0 0.0
    %54 = vmatprep.subr.mxu0 0.0
    %55 = vmatpush1.msra.mxu0 0.0
    %56 = vmatprep.subr.mxu0 0.0
    %57 = vmatpush1.msra.mxu0 0.0
    %58 = vmatprep.subr.mxu0 0.0
    %59 = vmatpush1.msra.mxu0 0.0
    %60 = vmatprep.subr.mxu0 0.0
    %61 = vmatpush1.msra.mxu0 0.0
    %62 = vmatprep.subr.mxu0 0.0
    %63 = vmatpush1.msra.mxu0 0.0
    %64 = vmatprep.subr.mxu0 0.0
    %65 = vmatpush1.msra.mxu0 0.0
    %66 = vmatprep.subr.mxu0 0.0
    %67 = vmatpush1.msra.mxu0 0.0
    %68 = vmatprep.subr.mxu0 0.0
    %69 = vmatpush1.msra.mxu0 0.0
    %70 = vmatprep.subr.mxu0 0.0
    %71 = vmatpush1.msra.mxu0 0.0
    %72 = vmatprep.subr.mxu0 0.0
    %73 = vmatpush1.msra.mxu0 0.0
    %74 = vmatprep.subr.mxu0 0.0
    %75 = vmatpush1.msra.mxu0 0.0
    %76 = vmatprep.subr.mxu0 0.0
    %77 = vmatpush1.msra.mxu0 0.0
    %78 = vmatprep.subr.mxu0 0.0
    %79 = vmatpush1.msra.mxu0 0.0
    %80 = vmatprep.subr.mxu0 0.0
    %81 = vmatpush1.msra.mxu0 0.0
    %82 = vmatprep.subr.mxu0 0.0
    %83 = vmatpush1.msra.mxu0 0.0
    %84 = vmatprep.subr.mxu0 0.0
    %85 = vmatpush1.msra.mxu0 0.0
    %86 = vmatprep.subr.mxu0 0.0
    %87 = vmatpush1.msra.mxu0 0.0
    %88 = vmatprep.subr.mxu0 0.0
    %89 = vmatpush1.msra.mxu0 0.0
    %90 = vmatprep.subr.mxu0 0.0
    %91 = vmatpush1.msra.mxu0 0.0
    %92 = vmatprep.subr.mxu0 0.0
    %93 = vmatpush1.msra.mxu0 0.0
    %94 = vmatprep.subr.mxu0 0.0
    %95 = vmatpush1.msra.mxu0 0.0
    %96 = vmatprep.subr.mxu0 0.0
    %97 = vmatpush1.msra.mxu0 0.0
    %98 = vmatprep.subr.mxu0 0.0
    %99 = vmatpush1.msra.mxu0 0.0
    %100 = vmatprep.subr.mxu0 0.0
    %101 = vmatpush1.msra.mxu0 0.0
    %102 = vmatprep.subr.mxu0 0.0
    %103 = vmatpush1.msra.mxu0 0.0
    %104 = vmatprep.subr.mxu0 0.0
    %105 = vmatpush1.msra.mxu0 0.0
    %106 = vmatprep.subr.mxu0 0.0
    %107 = vmatpush1.msra.mxu0 0.0
    %108 = vmatprep.mubr.f32.mxu0 0.0
    %109 = vmatmul.mubr.f32.gmra.mrb[0].mxu0 %v39
    %v110 = vpop.f32.mrb[0].mxu0
    %v111 = vadd.f32 %v35, %v110
    %v112 = vpop.f32.mrb[0].mxu0
    %113 = vmatprep.mubr.f32.mxu0 0.0
    %114 = vmatmul.mubr.f32.gmra.mrb[0].mxu0 %v42
    %v115 = vpop.f32.mrb[0].mxu0
    %v116 = vadd.f32 %v35, %v115
    %v117 = vpop.f32.mrb[0].mxu0
    %118 = vdwg.mxu0
    %v119 = vld [vmem:[%s2] sm:$0xff]
    %v120 = vld [vmem:[%s2 + $0x8] sm:$0xff]
    %v121 = vld [vmem:[%s2 + $0x10] sm:$0xff]
    %v122 = vld [vmem:[%s2 + $0x18] sm:$0xff]
    %v124 = vsel %vm37, 0.0, 0
    %126 = vmatprep.subr.mxu0 0.0
    %127 = vmatpush1.msra.mxu0 %v119
    %128 = vmatprep.subr.mxu0 0.0
    %129 = vmatpush1.msra.mxu0 %v120
    %130 = vmatprep.subr.mxu0 0.0
    %131 = vmatpush1.msra.mxu0 %v121
    %132 = vmatprep.subr.mxu0 0.0
    %133 = vmatpush1.msra.mxu0 %v122
    %134 = vmatprep.subr.mxu0 0.0
    %135 = vmatpush1.msra.mxu0 0.0
    %136 = vmatprep.subr.mxu0 0.0
    %137 = vmatpush1.msra.mxu0 0.0
    %138 = vmatprep.subr.mxu0 0.0
    %139 = vmatpush1.msra.mxu0 0.0
    %140 = vmatprep.subr.mxu0 0.0
    %141 = vmatpush1.msra.mxu0 0.0
    %142 = vmatprep.subr.mxu0 0.0
    %143 = vmatpush1.msra.mxu0 0.0
    %144 = vmatprep.subr.mxu0 0.0
    %145 = vmatpush1.msra.mxu0 0.0
    %146 = vmatprep.subr.mxu0 0.0
    %147 = vmatpush1.msra.mxu0 0.0
    %148 = vmatprep.subr.mxu0 0.0
    %149 = vmatpush1.msra.mxu0 0.0
    %150 = vmatprep.subr.mxu0 0.0
    %151 = vmatpush1.msra.mxu0 0.0
    %152 = vmatprep.subr.mxu0 0.0
    %153 = vmatpush1.msra.mxu0 0.0
    %154 = vmatprep.subr.mxu0 0.0
    %155 = vmatpush1.msra.mxu0 0.0
    %156 = vmatprep.subr.mxu0 0.0
    %157 = vmatpush1.msra.mxu0 0.0
    %158 = vmatprep.subr.mxu0 0.0
    %159 = vmatpush1.msra.mxu0 0.0
    %160 = vmatprep.subr.mxu0 0.0
    %161 = vmatpush1.msra.mxu0 0.0
    %162 = vmatprep.subr.mxu0 0.0
    %163 = vmatpush1.msra.mxu0 0.0
    %164 = vmatprep.subr.mxu0 0.0
    %165 = vmatpush1.msra.mxu0 0.0
    %166 = vmatprep.subr.mxu0 0.0
    %167 = vmatpush1.msra.mxu0 0.0
    %168 = vmatprep.subr.mxu0 0.0
    %169 = vmatpush1.msra.mxu0 0.0
    %170 = vmatprep.subr.mxu0 0.0
    %171 = vmatpush1.msra.mxu0 0.0
    %172 = vmatprep.subr.mxu0 0.0
    %173 = vmatpush1.msra.mxu0 0.0
    %174 = vmatprep.subr.mxu0 0.0
    %175 = vmatpush1.msra.mxu0 0.0
    %176 = vmatprep.subr.mxu0 0.0
    %177 = vmatpush1.msra.mxu0 0.0
    %178 = vmatprep.subr.mxu0 0.0
    %179 = vmatpush1.msra.mxu0 0.0
    %180 = vmatprep.subr.mxu0 0.0
    %181 = vmatpush1.msra.mxu0 0.0
    %182 = vmatprep.subr.mxu0 0.0
    %183 = vmatpush1.msra.mxu0 0.0
    %184 = vmatprep.subr.mxu0 0.0
    %185 = vmatpush1.msra.mxu0 0.0
    %186 = vmatprep.subr.mxu0 0.0
    %187 = vmatpush1.msra.mxu0 0.0
    %188 = vmatprep.subr.mxu0 0.0
    %189 = vmatpush1.msra.mxu0 0.0
    %190 = vmatprep.mubr.f32.mxu0 0.0
    %191 = vmatmul.mubr.f32.gmra.mrb[0].mxu0 %v124
    %v192 = vpop.f32.mrb[0].mxu0
    %v193 = vadd.f32 0.0, %v192
    %v194 = vpop.f32.mrb[0].mxu0
    %195 = vdwg.mxu0
    %v196 = vadd.f32 %v111, %v193
    %v197 = vxor.u32 %v196, 2147483648
    %v198 = vmul.f32 %v197, 1.442695
    %v199 = vpow.pop %v198
    %v200 = vadd.f32 %v199, 1.0
    %v201 = vrcp.pop %v200
    %v202 = vmul.f32 1.0, %v201
    %v203 = vtanh.pop %v196
    %v204 = vmul.f32 %v202, 0.0
    %206 = vrot.lane.b32.xlu0 %v203, 64
    %v207 = vpop.permute.xlu0 %206
    %v209 = vmul.f32 %v202, %v207
    %211 = vrot.lane.b32.xlu0 %v209, 32
    %v212 = vpop.permute.xlu0 %211
    %v214 = vadd.f32 %v204, %v212
    %v215 = vtanh.pop %v214
    %217 = vrot.lane.b32.xlu0 %v215, 64
    %v218 = vpop.permute.xlu0 %217
    %v220 = vmul.f32 %v202, %v218
    %222 = vrot.lane.b32.xlu0 %v220, 32
    %v223 = vpop.permute.xlu0 %222
    %v224 = vsel %vm37, %v223, 0
    %226 = vmatprep.subr.mxu0 0.0
    %227 = vmatpush1.msra.mxu0 %v119
    %228 = vmatprep.subr.mxu0 0.0
    %229 = vmatpush1.msra.mxu0 %v120
    %230 = vmatprep.subr.mxu0 0.0
    %231 = vmatpush1.msra.mxu0 %v121
    %232 = vmatprep.subr.mxu0 0.0
    %233 = vmatpush1.msra.mxu0 %v122
    %234 = vmatprep.subr.mxu0 0.0
    %235 = vmatpush1.msra.mxu0 0.0
    %236 = vmatprep.subr.mxu0 0.0
    %237 = vmatpush1.msra.mxu0 0.0
    %238 = vmatprep.subr.mxu0 0.0
    %239 = vmatpush1.msra.mxu0 0.0
    %240 = vmatprep.subr.mxu0 0.0
    %241 = vmatpush1.msra.mxu0 0.0
    %242 = vmatprep.subr.mxu0 0.0
    %243 = vmatpush1.msra.mxu0 0.0
    %244 = vmatprep.subr.mxu0 0.0
    %245 = vmatpush1.msra.mxu0 0.0
    %246 = vmatprep.subr.mxu0 0.0
    %247 = vmatpush1.msra.mxu0 0.0
    %248 = vmatprep.subr.mxu0 0.0
    %249 = vmatpush1.msra.mxu0 0.0
    %250 = vmatprep.subr.mxu0 0.0
    %251 = vmatpush1.msra.mxu0 0.0
    %252 = vmatprep.subr.mxu0 0.0
    %253 = vmatpush1.msra.mxu0 0.0
    %254 = vmatprep.subr.mxu0 0.0
    %255 = vmatpush1.msra.mxu0 0.0
    %256 = vmatprep.subr.mxu0 0.0
    %257 = vmatpush1.msra.mxu0 0.0
    %258 = vmatprep.subr.mxu0 0.0
    %259 = vmatpush1.msra.mxu0 0.0
    %260 = vmatprep.subr.mxu0 0.0
    %261 = vmatpush1.msra.mxu0 0.0
    %262 = vmatprep.subr.mxu0 0.0
    %263 = vmatpush1.msra.mxu0 0.0
    %264 = vmatprep.subr.mxu0 0.0
    %265 = vmatpush1.msra.mxu0 0.0
    %266 = vmatprep.subr.mxu0 0.0
    %267 = vmatpush1.msra.mxu0 0.0
    %268 = vmatprep.subr.mxu0 0.0
    %269 = vmatpush1.msra.mxu0 0.0
    %270 = vmatprep.subr.mxu0 0.0
    %271 = vmatpush1.msra.mxu0 0.0
    %272 = vmatprep.subr.mxu0 0.0
    %273 = vmatpush1.msra.mxu0 0.0
    %274 = vmatprep.subr.mxu0 0.0
    %275 = vmatpush1.msra.mxu0 0.0
    %276 = vmatprep.subr.mxu0 0.0
    %277 = vmatpush1.msra.mxu0 0.0
    %278 = vmatprep.subr.mxu0 0.0
    %279 = vmatpush1.msra.mxu0 0.0
    %280 = vmatprep.subr.mxu0 0.0
    %281 = vmatpush1.msra.mxu0 0.0
    %282 = vmatprep.subr.mxu0 0.0
    %283 = vmatpush1.msra.mxu0 0.0
    %284 = vmatprep.subr.mxu0 0.0
    %285 = vmatpush1.msra.mxu0 0.0
    %286 = vmatprep.subr.mxu0 0.0
    %287 = vmatpush1.msra.mxu0 0.0
    %288 = vmatprep.subr.mxu0 0.0
    %289 = vmatpush1.msra.mxu0 0.0
    %290 = vmatprep.mubr.f32.mxu0 0.0
    %291 = vmatmul.mubr.f32.gmra.mrb[0].mxu0 %v224
    %v292 = vpop.f32.mrb[0].mxu0
    %v293 = vadd.f32 0.0, %v292
    %v294 = vpop.f32.mrb[0].mxu0
    %295 = vdwg.mxu0
    %v297 = vrot.slane %v293, 6
    %v299 = vadd.f32 %v111, %v297
    %v300 = vxor.u32 %v299, 2147483648
    %v301 = vmul.f32 %v300, 1.442695
    %v302 = vpow.pop %v301
    %v303 = vadd.f32 %v302, 1.0
    %v304 = vrcp.pop %v303
    %v305 = vmul.f32 1.0, %v304
    %v306 = vtanh.pop %v299
    %v308 = vrot.slane %v214, 6
    %v310 = vmul.f32 %v305, %v308
    %312 = vrot.lane.b32.xlu0 %v306, 64
    %v313 = vpop.permute.xlu0 %312
    %v315 = vmul.f32 %v305, %v313
    %317 = vrot.lane.b32.xlu0 %v315, 32
    %v318 = vpop.permute.xlu0 %317
    %v320 = vadd.f32 %v310, %v318
    %v321 = vtanh.pop %v320
    %323 = vrot.lane.b32.xlu0 %v321, 64
    %v324 = vpop.permute.xlu0 %323
    %v326 = vmul.f32 %v305, %v324
    %v328 = vrot.slane %v326, 2
    %329 = vrot.lane.b32.xlu0 %v328, 32
    %v330 = vpop.permute.xlu0 %329
    %v331 = vsel %vm37, %v330, 0
    %333 = vmatprep.subr.mxu0 0.0
    %334 = vmatpush1.msra.mxu0 %v119
    %335 = vmatprep.subr.mxu0 0.0
    %336 = vmatpush1.msra.mxu0 %v120
    %337 = vmatprep.subr.mxu0 0.0
    %338 = vmatpush1.msra.mxu0 %v121
    %339 = vmatprep.subr.mxu0 0.0
    %340 = vmatpush1.msra.mxu0 %v122
    %341 = vmatprep.subr.mxu0 0.0
    %342 = vmatpush1.msra.mxu0 0.0
    %343 = vmatprep.subr.mxu0 0.0
    %344 = vmatpush1.msra.mxu0 0.0
    %345 = vmatprep.subr.mxu0 0.0
    %346 = vmatpush1.msra.mxu0 0.0
    %347 = vmatprep.subr.mxu0 0.0
    %348 = vmatpush1.msra.mxu0 0.0
    %349 = vmatprep.subr.mxu0 0.0
    %350 = vmatpush1.msra.mxu0 0.0
    %351 = vmatprep.subr.mxu0 0.0
    %352 = vmatpush1.msra.mxu0 0.0
    %353 = vmatprep.subr.mxu0 0.0
    %354 = vmatpush1.msra.mxu0 0.0
    %355 = vmatprep.subr.mxu0 0.0
    %356 = vmatpush1.msra.mxu0 0.0
    %357 = vmatprep.subr.mxu0 0.0
    %358 = vmatpush1.msra.mxu0 0.0
    %359 = vmatprep.subr.mxu0 0.0
    %360 = vmatpush1.msra.mxu0 0.0
    %361 = vmatprep.subr.mxu0 0.0
    %362 = vmatpush1.msra.mxu0 0.0
    %363 = vmatprep.subr.mxu0 0.0
    %364 = vmatpush1.msra.mxu0 0.0
    %365 = vmatprep.subr.mxu0 0.0
    %366 = vmatpush1.msra.mxu0 0.0
    %367 = vmatprep.subr.mxu0 0.0
    %368 = vmatpush1.msra.mxu0 0.0
    %369 = vmatprep.subr.mxu0 0.0
    %370 = vmatpush1.msra.mxu0 0.0
    %371 = vmatprep.subr.mxu0 0.0
    %372 = vmatpush1.msra.mxu0 0.0
    %373 = vmatprep.subr.mxu0 0.0
    %374 = vmatpush1.msra.mxu0 0.0
    %375 = vmatprep.subr.mxu0 0.0
    %376 = vmatpush1.msra.mxu0 0.0
    %377 = vmatprep.subr.mxu0 0.0
    %378 = vmatpush1.msra.mxu0 0.0
    %379 = vmatprep.subr.mxu0 0.0
    %380 = vmatpush1.msra.mxu0 0.0
    %381 = vmatprep.subr.mxu0 0.0
    %382 = vmatpush1.msra.mxu0 0.0
    %383 = vmatprep.subr.mxu0 0.0
    %384 = vmatpush1.msra.mxu0 0.0
    %385 = vmatprep.subr.mxu0 0.0
    %386 = vmatpush1.msra.mxu0 0.0
    %387 = vmatprep.subr.mxu0 0.0
    %388 = vmatpush1.msra.mxu0 0.0
    %389 = vmatprep.subr.mxu0 0.0
    %390 = vmatpush1.msra.mxu0 0.0
    %391 = vmatprep.subr.mxu0 0.0
    %392 = vmatpush1.msra.mxu0 0.0
    %393 = vmatprep.subr.mxu0 0.0
    %394 = vmatpush1.msra.mxu0 0.0
    %395 = vmatprep.subr.mxu0 0.0
    %396 = vmatpush1.msra.mxu0 0.0
    %397 = vmatprep.mubr.f32.mxu0 0.0
    %398 = vmatmul.mubr.f32.gmra.mrb[0].mxu0 %v331
    %v399 = vpop.f32.mrb[0].mxu0
    %v400 = vadd.f32 0.0, %v399
    %v401 = vpop.f32.mrb[0].mxu0
    %402 = vdwg.mxu0
    %v404 = vrot.slane %v400, 4
    %v406 = vadd.f32 %v111, %v404
    %v407 = vxor.u32 %v406, 2147483648
    %v408 = vmul.f32 %v407, 1.442695
    %v409 = vpow.pop %v408
    %v410 = vadd.f32 %v409, 1.0
    %v411 = vrcp.pop %v410
    %v412 = vmul.f32 1.0, %v411
    %v413 = vtanh.pop %v406
    %v415 = vrot.slane %v320, 6
    %v417 = vmul.f32 %v412, %v415
    %419 = vrot.lane.b32.xlu0 %v413, 64
    %v420 = vpop.permute.xlu0 %419
    %v422 = vmul.f32 %v412, %v420
    %424 = vrot.lane.b32.xlu0 %v422, 32
    %v425 = vpop.permute.xlu0 %424
    %v427 = vadd.f32 %v417, %v425
    %v428 = vtanh.pop %v427
    %430 = vrot.lane.b32.xlu0 %v428, 64
    %v431 = vpop.permute.xlu0 %430
    %v433 = vmul.f32 %v412, %v431
    %v435 = vrot.slane %v433, 4
    %436 = vrot.lane.b32.xlu0 %v435, 32
    %v437 = vpop.permute.xlu0 %436
    %v438 = vsel %vm37, %v437, 0
    %440 = vmatprep.subr.mxu0 0.0
    %441 = vmatpush1.msra.mxu0 %v119
    %442 = vmatprep.subr.mxu0 0.0
    %443 = vmatpush1.msra.mxu0 %v120
    %444 = vmatprep.subr.mxu0 0.0
    %445 = vmatpush1.msra.mxu0 %v121
    %446 = vmatprep.subr.mxu0 0.0
    %447 = vmatpush1.msra.mxu0 %v122
    %448 = vmatprep.subr.mxu0 0.0
    %449 = vmatpush1.msra.mxu0 0.0
    %450 = vmatprep.subr.mxu0 0.0
    %451 = vmatpush1.msra.mxu0 0.0
    %452 = vmatprep.subr.mxu0 0.0
    %453 = vmatpush1.msra.mxu0 0.0
    %454 = vmatprep.subr.mxu0 0.0
    %455 = vmatpush1.msra.mxu0 0.0
    %456 = vmatprep.subr.mxu0 0.0
    %457 = vmatpush1.msra.mxu0 0.0
    %458 = vmatprep.subr.mxu0 0.0
    %459 = vmatpush1.msra.mxu0 0.0
    %460 = vmatprep.subr.mxu0 0.0
    %461 = vmatpush1.msra.mxu0 0.0
    %462 = vmatprep.subr.mxu0 0.0
    %463 = vmatpush1.msra.mxu0 0.0
    %464 = vmatprep.subr.mxu0 0.0
    %465 = vmatpush1.msra.mxu0 0.0
    %466 = vmatprep.subr.mxu0 0.0
    %467 = vmatpush1.msra.mxu0 0.0
    %468 = vmatprep.subr.mxu0 0.0
    %469 = vmatpush1.msra.mxu0 0.0
    %470 = vmatprep.subr.mxu0 0.0
    %471 = vmatpush1.msra.mxu0 0.0
    %472 = vmatprep.subr.mxu0 0.0
    %473 = vmatpush1.msra.mxu0 0.0
    %474 = vmatprep.subr.mxu0 0.0
    %475 = vmatpush1.msra.mxu0 0.0
    %476 = vmatprep.subr.mxu0 0.0
    %477 = vmatpush1.msra.mxu0 0.0
    %478 = vmatprep.subr.mxu0 0.0
    %479 = vmatpush1.msra.mxu0 0.0
    %480 = vmatprep.subr.mxu0 0.0
    %481 = vmatpush1.msra.mxu0 0.0
    %482 = vmatprep.subr.mxu0 0.0
    %483 = vmatpush1.msra.mxu0 0.0
    %484 = vmatprep.subr.mxu0 0.0
    %485 = vmatpush1.msra.mxu0 0.0
    %486 = vmatprep.subr.mxu0 0.0
    %487 = vmatpush1.msra.mxu0 0.0
    %488 = vmatprep.subr.mxu0 0.0
    %489 = vmatpush1.msra.mxu0 0.0
    %490 = vmatprep.subr.mxu0 0.0
    %491 = vmatpush1.msra.mxu0 0.0
    %492 = vmatprep.subr.mxu0 0.0
    %493 = vmatpush1.msra.mxu0 0.0
    %494 = vmatprep.subr.mxu0 0.0
    %495 = vmatpush1.msra.mxu0 0.0
    %496 = vmatprep.subr.mxu0 0.0
    %497 = vmatpush1.msra.mxu0 0.0
    %498 = vmatprep.subr.mxu0 0.0
    %499 = vmatpush1.msra.mxu0 0.0
    %500 = vmatprep.subr.mxu0 0.0
    %501 = vmatpush1.msra.mxu0 0.0
    %502 = vmatprep.subr.mxu0 0.0
    %503 = vmatpush1.msra.mxu0 0.0
    %504 = vmatprep.mubr.f32.mxu0 0.0
    %505 = vmatmul.mubr.f32.gmra.mrb[0].mxu0 %v438
    %v506 = vpop.f32.mrb[0].mxu0
    %v507 = vadd.f32 0.0, %v506
    %v508 = vpop.f32.mrb[0].mxu0
    %509 = vdwg.mxu0
    %v511 = vrot.slane %v507, 2
    %v513 = vadd.f32 %v111, %v511
    %v514 = vxor.u32 %v513, 2147483648
    %v515 = vmul.f32 %v514, 1.442695
    %v516 = vpow.pop %v515
    %v517 = vadd.f32 %v516, 1.0
    %v518 = vrcp.pop %v517
    %v519 = vmul.f32 1.0, %v518
    %v520 = vtanh.pop %v513
    %v522 = vrot.slane %v427, 6
    %v524 = vmul.f32 %v519, %v522
    %526 = vrot.lane.b32.xlu0 %v520, 64
    %v527 = vpop.permute.xlu0 %526
    %v529 = vmul.f32 %v519, %v527
    %531 = vrot.lane.b32.xlu0 %v529, 32
    %v532 = vpop.permute.xlu0 %531
    %v534 = vadd.f32 %v524, %v532
    %v535 = vtanh.pop %v534
    %537 = vrot.lane.b32.xlu0 %v535, 64
    %v538 = vpop.permute.xlu0 %537
    %v540 = vmul.f32 %v519, %v538
    %v542 = vrot.slane %v540, 6
    %543 = vrot.lane.b32.xlu0 %v542, 32
    %v544 = vpop.permute.xlu0 %543
    %v545 = vsel %vm37, %v544, 0
    %547 = vmatprep.subr.mxu0 0.0
    %548 = vmatpush1.msra.mxu0 %v119
    %549 = vmatprep.subr.mxu0 0.0
    %550 = vmatpush1.msra.mxu0 %v120
    %551 = vmatprep.subr.mxu0 0.0
    %552 = vmatpush1.msra.mxu0 %v121
    %553 = vmatprep.subr.mxu0 0.0
    %554 = vmatpush1.msra.mxu0 %v122
    %555 = vmatprep.subr.mxu0 0.0
    %556 = vmatpush1.msra.mxu0 0.0
    %557 = vmatprep.subr.mxu0 0.0
    %558 = vmatpush1.msra.mxu0 0.0
    %559 = vmatprep.subr.mxu0 0.0
    %560 = vmatpush1.msra.mxu0 0.0
    %561 = vmatprep.subr.mxu0 0.0
    %562 = vmatpush1.msra.mxu0 0.0
    %563 = vmatprep.subr.mxu0 0.0
    %564 = vmatpush1.msra.mxu0 0.0
    %565 = vmatprep.subr.mxu0 0.0
    %566 = vmatpush1.msra.mxu0 0.0
    %567 = vmatprep.subr.mxu0 0.0
    %568 = vmatpush1.msra.mxu0 0.0
    %569 = vmatprep.subr.mxu0 0.0
    %570 = vmatpush1.msra.mxu0 0.0
    %571 = vmatprep.subr.mxu0 0.0
    %572 = vmatpush1.msra.mxu0 0.0
    %573 = vmatprep.subr.mxu0 0.0
    %574 = vmatpush1.msra.mxu0 0.0
    %575 = vmatprep.subr.mxu0 0.0
    %576 = vmatpush1.msra.mxu0 0.0
    %577 = vmatprep.subr.mxu0 0.0
    %578 = vmatpush1.msra.mxu0 0.0
    %579 = vmatprep.subr.mxu0 0.0
    %580 = vmatpush1.msra.mxu0 0.0
    %581 = vmatprep.subr.mxu0 0.0
    %582 = vmatpush1.msra.mxu0 0.0
    %583 = vmatprep.subr.mxu0 0.0
    %584 = vmatpush1.msra.mxu0 0.0
    %585 = vmatprep.subr.mxu0 0.0
    %586 = vmatpush1.msra.mxu0 0.0
    %587 = vmatprep.subr.mxu0 0.0
    %588 = vmatpush1.msra.mxu0 0.0
    %589 = vmatprep.subr.mxu0 0.0
    %590 = vmatpush1.msra.mxu0 0.0
    %591 = vmatprep.subr.mxu0 0.0
    %592 = vmatpush1.msra.mxu0 0.0
    %593 = vmatprep.subr.mxu0 0.0
    %594 = vmatpush1.msra.mxu0 0.0
    %595 = vmatprep.subr.mxu0 0.0
    %596 = vmatpush1.msra.mxu0 0.0
    %597 = vmatprep.subr.mxu0 0.0
    %598 = vmatpush1.msra.mxu0 0.0
    %599 = vmatprep.subr.mxu0 0.0
    %600 = vmatpush1.msra.mxu0 0.0
    %601 = vmatprep.subr.mxu0 0.0
    %602 = vmatpush1.msra.mxu0 0.0
    %603 = vmatprep.subr.mxu0 0.0
    %604 = vmatpush1.msra.mxu0 0.0
    %605 = vmatprep.subr.mxu0 0.0
    %606 = vmatpush1.msra.mxu0 0.0
    %607 = vmatprep.subr.mxu0 0.0
    %608 = vmatpush1.msra.mxu0 0.0
    %609 = vmatprep.subr.mxu0 0.0
    %610 = vmatpush1.msra.mxu0 0.0
    %611 = vmatprep.mubr.f32.mxu0 0.0
    %612 = vmatmul.mubr.f32.gmra.mrb[0].mxu0 %v545
    %v613 = vpop.f32.mrb[0].mxu0
    %v614 = vadd.f32 0.0, %v613
    %v615 = vpop.f32.mrb[0].mxu0
    %616 = vdwg.mxu0
    %v617 = vadd.f32 %v116, %v614
    %v618 = vxor.u32 %v617, 2147483648
    %v619 = vmul.f32 %v618, 1.442695
    %v620 = vpow.pop %v619
    %v621 = vadd.f32 %v620, 1.0
    %v622 = vrcp.pop %v621
    %v623 = vmul.f32 1.0, %v622
    %v624 = vtanh.pop %v617
    %v626 = vrot.slane %v534, 6
    %v628 = vmul.f32 %v623, %v626
    %630 = vrot.lane.b32.xlu0 %v624, 64
    %v631 = vpop.permute.xlu0 %630
    %v633 = vmul.f32 %v623, %v631
    %635 = vrot.lane.b32.xlu0 %v633, 32
    %v636 = vpop.permute.xlu0 %635
    %v638 = vadd.f32 %v628, %v636
    %v639 = vtanh.pop %v638
    %641 = vrot.lane.b32.xlu0 %v639, 64
    %v642 = vpop.permute.xlu0 %641
    %v644 = vmul.f32 %v623, %v642
    %646 = vrot.lane.b32.xlu0 %v644, 32
    %v647 = vpop.permute.xlu0 %646
    %v648 = vsel %vm37, %v647, 0
    %650 = vmatprep.subr.mxu0 0.0
    %651 = vmatpush1.msra.mxu0 %v119
    %652 = vmatprep.subr.mxu0 0.0
    %653 = vmatpush1.msra.mxu0 %v120
    %654 = vmatprep.subr.mxu0 0.0
    %655 = vmatpush1.msra.mxu0 %v121
    %656 = vmatprep.subr.mxu0 0.0
    %657 = vmatpush1.msra.mxu0 %v122
    %658 = vmatprep.subr.mxu0 0.0
    %659 = vmatpush1.msra.mxu0 0.0
    %660 = vmatprep.subr.mxu0 0.0
    %661 = vmatpush1.msra.mxu0 0.0
    %662 = vmatprep.subr.mxu0 0.0
    %663 = vmatpush1.msra.mxu0 0.0
    %664 = vmatprep.subr.mxu0 0.0
    %665 = vmatpush1.msra.mxu0 0.0
    %666 = vmatprep.subr.mxu0 0.0
    %667 = vmatpush1.msra.mxu0 0.0
    %668 = vmatprep.subr.mxu0 0.0
    %669 = vmatpush1.msra.mxu0 0.0
    %670 = vmatprep.subr.mxu0 0.0
    %671 = vmatpush1.msra.mxu0 0.0
    %672 = vmatprep.subr.mxu0 0.0
    %673 = vmatpush1.msra.mxu0 0.0
    %674 = vmatprep.subr.mxu0 0.0
    %675 = vmatpush1.msra.mxu0 0.0
    %676 = vmatprep.subr.mxu0 0.0
    %677 = vmatpush1.msra.mxu0 0.0
    %678 = vmatprep.subr.mxu0 0.0
    %679 = vmatpush1.msra.mxu0 0.0
    %680 = vmatprep.subr.mxu0 0.0
    %681 = vmatpush1.msra.mxu0 0.0
    %682 = vmatprep.subr.mxu0 0.0
    %683 = vmatpush1.msra.mxu0 0.0
    %684 = vmatprep.subr.mxu0 0.0
    %685 = vmatpush1.msra.mxu0 0.0
    %686 = vmatprep.subr.mxu0 0.0
    %687 = vmatpush1.msra.mxu0 0.0
    %688 = vmatprep.subr.mxu0 0.0
    %689 = vmatpush1.msra.mxu0 0.0
    %690 = vmatprep.subr.mxu0 0.0
    %691 = vmatpush1.msra.mxu0 0.0
    %692 = vmatprep.subr.mxu0 0.0
    %693 = vmatpush1.msra.mxu0 0.0
    %694 = vmatprep.subr.mxu0 0.0
    %695 = vmatpush1.msra.mxu0 0.0
    %696 = vmatprep.subr.mxu0 0.0
    %697 = vmatpush1.msra.mxu0 0.0
    %698 = vmatprep.subr.mxu0 0.0
    %699 = vmatpush1.msra.mxu0 0.0
    %700 = vmatprep.subr.mxu0 0.0
    %701 = vmatpush1.msra.mxu0 0.0
    %702 = vmatprep.subr.mxu0 0.0
    %703 = vmatpush1.msra.mxu0 0.0
    %704 = vmatprep.subr.mxu0 0.0
    %705 = vmatpush1.msra.mxu0 0.0
    %706 = vmatprep.subr.mxu0 0.0
    %707 = vmatpush1.msra.mxu0 0.0
    %708 = vmatprep.subr.mxu0 0.0
    %709 = vmatpush1.msra.mxu0 0.0
    %710 = vmatprep.subr.mxu0 0.0
    %711 = vmatpush1.msra.mxu0 0.0
    %712 = vmatprep.subr.mxu0 0.0
    %713 = vmatpush1.msra.mxu0 0.0
    %714 = vmatprep.mubr.f32.mxu0 0.0
    %715 = vmatmul.mubr.f32.gmra.mrb[0].mxu0 %v648
    %v716 = vpop.f32.mrb[0].mxu0
    %v717 = vadd.f32 0.0, %v716
    %v718 = vpop.f32.mrb[0].mxu0
    %719 = vdwg.mxu0
    %v721 = vrot.slane %v717, 6
    %v723 = vadd.f32 %v116, %v721
    %v724 = vxor.u32 %v723, 2147483648
    %v725 = vmul.f32 %v724, 1.442695
    %v726 = vpow.pop %v725
    %v727 = vadd.f32 %v726, 1.0
    %v728 = vrcp.pop %v727
    %v729 = vmul.f32 1.0, %v728
    %v730 = vtanh.pop %v723
    %v732 = vrot.slane %v638, 6
    %v734 = vmul.f32 %v729, %v732
    %736 = vrot.lane.b32.xlu0 %v730, 64
    %v737 = vpop.permute.xlu0 %736
    %v739 = vmul.f32 %v729, %v737
    %741 = vrot.lane.b32.xlu0 %v739, 32
    %v742 = vpop.permute.xlu0 %741
    %v744 = vadd.f32 %v734, %v742
    %v745 = vtanh.pop %v744
    %747 = vrot.lane.b32.xlu0 %v745, 64
    %v748 = vpop.permute.xlu0 %747
    %v750 = vmul.f32 %v729, %v748
    %v752 = vrot.slane %v750, 2
    %753 = vrot.lane.b32.xlu0 %v752, 32
    %v754 = vpop.permute.xlu0 %753
    %v755 = vsel %vm37, %v754, 0
    %757 = vmatprep.subr.mxu0 0.0
    %758 = vmatpush1.msra.mxu0 %v119
    %759 = vmatprep.subr.mxu0 0.0
    %760 = vmatpush1.msra.mxu0 %v120
    %761 = vmatprep.subr.mxu0 0.0
    %762 = vmatpush1.msra.mxu0 %v121
    %763 = vmatprep.subr.mxu0 0.0
    %764 = vmatpush1.msra.mxu0 %v122
    %765 = vmatprep.subr.mxu0 0.0
    %766 = vmatpush1.msra.mxu0 0.0
    %767 = vmatprep.subr.mxu0 0.0
    %768 = vmatpush1.msra.mxu0 0.0
    %769 = vmatprep.subr.mxu0 0.0
    %770 = vmatpush1.msra.mxu0 0.0
    %771 = vmatprep.subr.mxu0 0.0
    %772 = vmatpush1.msra.mxu0 0.0
    %773 = vmatprep.subr.mxu0 0.0
    %774 = vmatpush1.msra.mxu0 0.0
    %775 = vmatprep.subr.mxu0 0.0
    %776 = vmatpush1.msra.mxu0 0.0
    %777 = vmatprep.subr.mxu0 0.0
    %778 = vmatpush1.msra.mxu0 0.0
    %779 = vmatprep.subr.mxu0 0.0
    %780 = vmatpush1.msra.mxu0 0.0
    %781 = vmatprep.subr.mxu0 0.0
    %782 = vmatpush1.msra.mxu0 0.0
    %783 = vmatprep.subr.mxu0 0.0
    %784 = vmatpush1.msra.mxu0 0.0
    %785 = vmatprep.subr.mxu0 0.0
    %786 = vmatpush1.msra.mxu0 0.0
    %787 = vmatprep.subr.mxu0 0.0
    %788 = vmatpush1.msra.mxu0 0.0
    %789 = vmatprep.subr.mxu0 0.0
    %790 = vmatpush1.msra.mxu0 0.0
    %791 = vmatprep.subr.mxu0 0.0
    %792 = vmatpush1.msra.mxu0 0.0
    %793 = vmatprep.subr.mxu0 0.0
    %794 = vmatpush1.msra.mxu0 0.0
    %795 = vmatprep.subr.mxu0 0.0
    %796 = vmatpush1.msra.mxu0 0.0
    %797 = vmatprep.subr.mxu0 0.0
    %798 = vmatpush1.msra.mxu0 0.0
    %799 = vmatprep.subr.mxu0 0.0
    %800 = vmatpush1.msra.mxu0 0.0
    %801 = vmatprep.subr.mxu0 0.0
    %802 = vmatpush1.msra.mxu0 0.0
    %803 = vmatprep.subr.mxu0 0.0
    %804 = vmatpush1.msra.mxu0 0.0
    %805 = vmatprep.subr.mxu0 0.0
    %806 = vmatpush1.msra.mxu0 0.0
    %807 = vmatprep.subr.mxu0 0.0
    %808 = vmatpush1.msra.mxu0 0.0
    %809 = vmatprep.subr.mxu0 0.0
    %810 = vmatpush1.msra.mxu0 0.0
    %811 = vmatprep.subr.mxu0 0.0
    %812 = vmatpush1.msra.mxu0 0.0
    %813 = vmatprep.subr.mxu0 0.0
    %814 = vmatpush1.msra.mxu0 0.0
    %815 = vmatprep.subr.mxu0 0.0
    %816 = vmatpush1.msra.mxu0 0.0
    %817 = vmatprep.subr.mxu0 0.0
    %818 = vmatpush1.msra.mxu0 0.0
    %819 = vmatprep.subr.mxu0 0.0
    %820 = vmatpush1.msra.mxu0 0.0
    %821 = vmatprep.mubr.f32.mxu0 0.0
    %822 = vmatmul.mubr.f32.gmra.mrb[0].mxu0 %v755
    %v823 = vpop.f32.mrb[0].mxu0
    %v824 = vadd.f32 0.0, %v823
    %v825 = vpop.f32.mrb[0].mxu0
    %826 = vdwg.mxu0
    %v828 = vrot.slane %v824, 4
    %v830 = vadd.f32 %v116, %v828
    %v831 = vxor.u32 %v830, 2147483648
    %v832 = vmul.f32 %v831, 1.442695
    %v833 = vpow.pop %v832
    %v834 = vadd.f32 %v833, 1.0
    %v835 = vrcp.pop %v834
    %v836 = vmul.f32 1.0, %v835
    %v837 = vtanh.pop %v830
    %v839 = vrot.slane %v744, 6
    %v841 = vmul.f32 %v836, %v839
    %843 = vrot.lane.b32.xlu0 %v837, 64
    %v844 = vpop.permute.xlu0 %843
    %v846 = vmul.f32 %v836, %v844
    %848 = vrot.lane.b32.xlu0 %v846, 32
    %v849 = vpop.permute.xlu0 %848
    %v851 = vadd.f32 %v841, %v849
    %v852 = vtanh.pop %v851
    %854 = vrot.lane.b32.xlu0 %v852, 64
    %v855 = vpop.permute.xlu0 %854
    %v857 = vmul.f32 %v836, %v855
    %v859 = vrot.slane %v857, 4
    %860 = vrot.lane.b32.xlu0 %v859, 32
    %v861 = vpop.permute.xlu0 %860
    %v862 = vsel %vm37, %v861, 0
    %864 = vmatprep.subr.mxu0 0.0
    %865 = vmatpush1.msra.mxu0 %v119
    %866 = vmatprep.subr.mxu0 0.0
    %867 = vmatpush1.msra.mxu0 %v120
    %868 = vmatprep.subr.mxu0 0.0
    %869 = vmatpush1.msra.mxu0 %v121
    %870 = vmatprep.subr.mxu0 0.0
    %871 = vmatpush1.msra.mxu0 %v122
    %872 = vmatprep.subr.mxu0 0.0
    %873 = vmatpush1.msra.mxu0 0.0
    %874 = vmatprep.subr.mxu0 0.0
    %875 = vmatpush1.msra.mxu0 0.0
    %876 = vmatprep.subr.mxu0 0.0
    %877 = vmatpush1.msra.mxu0 0.0
    %878 = vmatprep.subr.mxu0 0.0
    %879 = vmatpush1.msra.mxu0 0.0
    %880 = vmatprep.subr.mxu0 0.0
    %881 = vmatpush1.msra.mxu0 0.0
    %882 = vmatprep.subr.mxu0 0.0
    %883 = vmatpush1.msra.mxu0 0.0
    %884 = vmatprep.subr.mxu0 0.0
    %885 = vmatpush1.msra.mxu0 0.0
    %886 = vmatprep.subr.mxu0 0.0
    %887 = vmatpush1.msra.mxu0 0.0
    %888 = vmatprep.subr.mxu0 0.0
    %889 = vmatpush1.msra.mxu0 0.0
    %890 = vmatprep.subr.mxu0 0.0
    %891 = vmatpush1.msra.mxu0 0.0
    %892 = vmatprep.subr.mxu0 0.0
    %893 = vmatpush1.msra.mxu0 0.0
    %894 = vmatprep.subr.mxu0 0.0
    %895 = vmatpush1.msra.mxu0 0.0
    %896 = vmatprep.subr.mxu0 0.0
    %897 = vmatpush1.msra.mxu0 0.0
    %898 = vmatprep.subr.mxu0 0.0
    %899 = vmatpush1.msra.mxu0 0.0
    %900 = vmatprep.subr.mxu0 0.0
    %901 = vmatpush1.msra.mxu0 0.0
    %902 = vmatprep.subr.mxu0 0.0
    %903 = vmatpush1.msra.mxu0 0.0
    %904 = vmatprep.subr.mxu0 0.0
    %905 = vmatpush1.msra.mxu0 0.0
    %906 = vmatprep.subr.mxu0 0.0
    %907 = vmatpush1.msra.mxu0 0.0
    %908 = vmatprep.subr.mxu0 0.0
    %909 = vmatpush1.msra.mxu0 0.0
    %910 = vmatprep.subr.mxu0 0.0
    %911 = vmatpush1.msra.mxu0 0.0
    %912 = vmatprep.subr.mxu0 0.0
    %913 = vmatpush1.msra.mxu0 0.0
    %914 = vmatprep.subr.mxu0 0.0
    %915 = vmatpush1.msra.mxu0 0.0
    %916 = vmatprep.subr.mxu0 0.0
    %917 = vmatpush1.msra.mxu0 0.0
    %918 = vmatprep.subr.mxu0 0.0
    %919 = vmatpush1.msra.mxu0 0.0
    %920 = vmatprep.subr.mxu0 0.0
    %921 = vmatpush1.msra.mxu0 0.0
    %922 = vmatprep.subr.mxu0 0.0
    %923 = vmatpush1.msra.mxu0 0.0
    %924 = vmatprep.subr.mxu0 0.0
    %925 = vmatpush1.msra.mxu0 0.0
    %926 = vmatprep.subr.mxu0 0.0
    %927 = vmatpush1.msra.mxu0 0.0
    %928 = vmatprep.mubr.f32.mxu0 0.0
    %929 = vmatmul.mubr.f32.gmra.mrb[0].mxu0 %v862
    %v930 = vpop.f32.mrb[0].mxu0
    %v931 = vadd.f32 0.0, %v930
    %v932 = vpop.f32.mrb[0].mxu0
    %933 = vdwg.mxu0
    %v935 = vrot.slane %v931, 2
    %v937 = vadd.f32 %v116, %v935
    %v938 = vxor.u32 %v937, 2147483648
    %v939 = vmul.f32 %v938, 1.442695
    %v940 = vpow.pop %v939
    %v941 = vadd.f32 %v940, 1.0
    %v942 = vrcp.pop %v941
    %v943 = vmul.f32 1.0, %v942
    %v944 = vtanh.pop %v937
    %v946 = vrot.slane %v851, 6
    %v948 = vmul.f32 %v943, %v946
    %950 = vrot.lane.b32.xlu0 %v944, 64
    %v951 = vpop.permute.xlu0 %950
    %v953 = vmul.f32 %v943, %v951
    %955 = vrot.lane.b32.xlu0 %v953, 32
    %v956 = vpop.permute.xlu0 %955
    %v958 = vadd.f32 %v948, %v956
    %v959 = vtanh.pop %v958
    %961 = vrot.lane.b32.xlu0 %v959, 64
    %v962 = vpop.permute.xlu0 %961
    %v964 = vmul.f32 %v943, %v962
    %v965 = vld [vmem:[%s4] sm:$0xff]
    %v966 = vld [vmem:[%s4 + $0x8] sm:$0xff]
    %v967 = vld [vmem:[%s4 + $0x10] sm:$0xff]
    %v968 = vld [vmem:[%s4 + $0x18] sm:$0xff]
    %v969 = vld [vmem:[%s5] sm:$0x1]
    %v971 = vlaneseq
    %v972 = vshrl.u32 %v971, 7
    %v973 = vsub.s32 0, %v972
    %v974 = vrot.slane %v969, %v973
    %v977 = vrot.slane %v964, 6
    %978 = vrot.lane.b32.xlu0 %v977, 32
    %v979 = vpop.permute.xlu0 %978
    %v980 = vsel %vm37, %v979, 0
    %982 = vmatprep.subr.mxu0 0.0
    %983 = vmatpush1.msra.mxu0 %v965
    %984 = vmatprep.subr.mxu0 0.0
    %985 = vmatpush1.msra.mxu0 %v966
    %986 = vmatprep.subr.mxu0 0.0
    %987 = vmatpush1.msra.mxu0 %v967
    %988 = vmatprep.subr.mxu0 0.0
    %989 = vmatpush1.msra.mxu0 %v968
    %990 = vmatprep.subr.mxu0 0.0
    %991 = vmatpush1.msra.mxu0 0.0
    %992 = vmatprep.subr.mxu0 0.0
    %993 = vmatpush1.msra.mxu0 0.0
    %994 = vmatprep.subr.mxu0 0.0
    %995 = vmatpush1.msra.mxu0 0.0
    %996 = vmatprep.subr.mxu0 0.0
    %997 = vmatpush1.msra.mxu0 0.0
    %998 = vmatprep.subr.mxu0 0.0
    %999 = vmatpush1.msra.mxu0 0.0
    %1000 = vmatprep.subr.mxu0 0.0
    %1001 = vmatpush1.msra.mxu0 0.0
    %1002 = vmatprep.subr.mxu0 0.0
    %1003 = vmatpush1.msra.mxu0 0.0
    %1004 = vmatprep.subr.mxu0 0.0
    %1005 = vmatpush1.msra.mxu0 0.0
    %1006 = vmatprep.subr.mxu0 0.0
    %1007 = vmatpush1.msra.mxu0 0.0
    %1008 = vmatprep.subr.mxu0 0.0
    %1009 = vmatpush1.msra.mxu0 0.0
    %1010 = vmatprep.subr.mxu0 0.0
    %1011 = vmatpush1.msra.mxu0 0.0
    %1012 = vmatprep.subr.mxu0 0.0
    %1013 = vmatpush1.msra.mxu0 0.0
    %1014 = vmatprep.subr.mxu0 0.0
    %1015 = vmatpush1.msra.mxu0 0.0
    %1016 = vmatprep.subr.mxu0 0.0
    %1017 = vmatpush1.msra.mxu0 0.0
    %1018 = vmatprep.subr.mxu0 0.0
    %1019 = vmatpush1.msra.mxu0 0.0
    %1020 = vmatprep.subr.mxu0 0.0
    %1021 = vmatpush1.msra.mxu0 0.0
    %1022 = vmatprep.subr.mxu0 0.0
    %1023 = vmatpush1.msra.mxu0 0.0
    %1024 = vmatprep.subr.mxu0 0.0
    %1025 = vmatpush1.msra.mxu0 0.0
    %1026 = vmatprep.subr.mxu0 0.0
    %1027 = vmatpush1.msra.mxu0 0.0
    %1028 = vmatprep.subr.mxu0 0.0
    %1029 = vmatpush1.msra.mxu0 0.0
    %1030 = vmatprep.subr.mxu0 0.0
    %1031 = vmatpush1.msra.mxu0 0.0
    %1032 = vmatprep.subr.mxu0 0.0
    %1033 = vmatpush1.msra.mxu0 0.0
    %1034 = vmatprep.subr.mxu0 0.0
    %1035 = vmatpush1.msra.mxu0 0.0
    %1036 = vmatprep.subr.mxu0 0.0
    %1037 = vmatpush1.msra.mxu0 0.0
    %1038 = vmatprep.subr.mxu0 0.0
    %1039 = vmatpush1.msra.mxu0 0.0
    %1040 = vmatprep.subr.mxu0 0.0
    %1041 = vmatpush1.msra.mxu0 0.0
    %1042 = vmatprep.subr.mxu0 0.0
    %1043 = vmatpush1.msra.mxu0 0.0
    %1044 = vmatprep.subr.mxu0 0.0
    %1045 = vmatpush1.msra.mxu0 0.0
    %1046 = vmatprep.mubr.f32.mxu0 0.0
    %1047 = vmatmul.mubr.f32.gmra.mrb[0].mxu0 %v980
    %v1048 = vpop.f32.mrb[0].mxu0
    %v1049 = vadd.f32 %v974, %v1048
    %v1050 = vpop.f32.mrb[0].mxu0
    %1051 = vdwg.mxu0
    %vm1052 = vcmask 17408
    %1053 = vst.msk [vmem:[#allocation2] sm:$0x3] %vm1052, %v1049
    // Predicated region
    $region26: #{lstm_model_forward.3} parent=1 // pred_check
      _
    $region27: #{lstm_model_forward.3} parent=1 // pred_check_branch
      %1055 = sbr.rel (0) target = $region29
    $region28: #{lstm_model_forward.3} parent=1 // pred_region
      %s1057 = ssub.s32 32, 32
      %1058 = vsyncadd [#allocation3], %s1057
      %s1060 = sshll.u32 [#allocation2], 4
      %s1061 = int_to_ptr.vmem [resolvable:$true] %s1060
      %1063 = dma.vmem_to_hbm [thread:$0]  %s1061, 32, %s6, [#allocation3]
    $region29: #{lstm_model_forward.3} parent=1 // pred_fallthru
      _
    // Predicated region
    $region30: #{lstm_model_forward.3} parent=1 // pred_check
      _
    $region31: #{lstm_model_forward.3} parent=1 // pred_check_branch
      %1065 = sbr.rel (0) target = $region33
    $region32: #{lstm_model_forward.3} parent=1 // pred_region
      %1066 = dma.done [#allocation3], 32
    $region33: #{lstm_model_forward.3} parent=1 // pred_fallthru
      _
    %1067 = vsyncpa [#allocation3], 1

</llo_original>
